<compile_context>
chip_gen: v5e
topology: v5e:2x2
jax: 0.10.0
libtpu: 0.0.40
codegen_flags: <defaults>
</compile_context>

<pallas_src>
import functools

import numpy as np
import jax
import jax.numpy as jnp
from jax.experimental import pallas as pl
from jax.experimental.pallas import tpu as pltpu

_VMEM_SPEC = pl.BlockSpec(memory_space=pltpu.MemorySpace.VMEM)


# ------------------------------ fused kernel ------------------------------- #

def _digit_classifier_kernel(x_ref, w1_ref, b1_ref, w2_ref, b2_ref,
                             w3_ref, b3_ref, w4_ref, b4_ref, w5_ref, b5_ref,
                             out_ref):
    f32, bf16 = jnp.float32, jnp.bfloat16

    def mm(a, w):  # MXU matmul: bf16 operands, f32 accumulation
        return jnp.dot(a.astype(bf16), w, preferred_element_type=f32)

    w1, b1 = w1_ref[...], b1_ref[...]
    w2, b2 = w2_ref[...], b2_ref[...]

    x = x_ref[...]                      # (B, 28, 28) f32
    batch = x.shape[0]

    flats = []
    for b in range(batch):              # static unroll; tiny batch (see TODO)
        xb = x[b]                                                   # (28, 28)

        # conv1 5x5, 1->6 (+bias+ReLU) as one row-Toeplitz matmul.
        # xcat1[oh, dh*28 + w] = x[b, oh+dh, w]
        xcat1 = jnp.concatenate([xb[dh:dh + 24, :] for dh in range(5)], axis=1)
        y1 = jnp.maximum(mm(xcat1, w1) + b1, 0.0)   # (24, 144) = [oh, ow*6+co]

        # maxpool1 2x2: shifted-slice maxima; valid at rows 2*ph, lanes 12*pw+c.
        h1 = jnp.maximum(y1[0:23, :], y1[1:24, :])                  # (23, 144)
        p1 = jnp.maximum(h1[:, 0:138], h1[:, 6:144])                # (23, 138)

        # conv2 3x3, 6->20 (+bias+ReLU): Toeplitz matmul over the uncompacted
        # pool-1 layout (w2 has zero rows at junk lane positions).
        # xcat2[r, dh*138 + l] = p1[r + 2*dh, l]; valid output rows r = 2*oh.
        xcat2 = jnp.concatenate(
            [p1[2 * dh:2 * dh + 19, :] for dh in range(3)], axis=1)  # (19, 414)
        y2 = jnp.maximum(mm(xcat2, w2) + b2, 0.0)   # (19, 200) = [2*oh, ow*20+co]

        # maxpool2 2x2: valid at rows 4*q, lanes 40*pw+c.
        h2 = jnp.maximum(y2[0:17, :], y2[2:19, :])                  # (17, 200)
        p2 = jnp.maximum(h2[:, 0:180], h2[:, 20:200])               # (17, 180)

        # flatten: lane-concat the 5 valid rows -> (1, 900).  The PyTorch NCHW
        # flatten order + junk-lane masking is folded into w3 at pack time.
        flats.append(jnp.concatenate(
            [p2[4 * q:4 * q + 1, :] for q in range(5)], axis=1))

    flat = jnp.concatenate(flats, axis=0)                           # (B, 900)

    # FC head: lin1+ReLU, lin2+ReLU, lin3.
    a1 = jnp.maximum(mm(flat, w3_ref[...]) + b3_ref[...], 0.0)      # (B, 120)
    a2 = jnp.maximum(mm(a1, w4_ref[...]) + b4_ref[...], 0.0)        # (B, 84)
    out_ref[...] = mm(a2, w5_ref[...]) + b5_ref[...]                # (B, 10)


# ------------------------------- entry point -------------------------------- #

# TODO(synk): for large batch sizes, tile B with a grid
# (dimension_semantics=("parallel",)) so v7x's two TensorCores split the work
# and per-tile VMEM stays within the 16-32 MiB scoped limits.
@jax.jit
def digit_classifier_forward(packed, x_nchw):
    b = x_nchw.shape[0]
    x = x_nchw.astype(jnp.float32).reshape(b, 28, 28)   # NCHW with C=1
    return pl.pallas_call(
        _digit_classifier_kernel,
        out_shape=jax.ShapeDtypeStruct((b, 10), jnp.float32),
        in_specs=[_VMEM_SPEC] * 11,
        out_specs=_VMEM_SPEC,
    )(x, packed["w1"], packed["b1"], packed["w2"], packed["b2"],
      packed["w3"], packed["b3"], packed["w4"], packed["b4"],
      packed["w5"], packed["b5"])


# --------------------- one-time parameter repacking ------------------------- #

def pack_params(params):
    """Convert PyTorch-layout DigitClassifier params into the packed /
    Toeplitz layout consumed by the fused Pallas kernel (runs once, host-side)."""
    c1w = np.asarray(params["conv1_w"], np.float32)   # (6, 1, 5, 5)
    c1b = np.asarray(params["conv1_b"], np.float32)   # (6,)
    c2w = np.asarray(params["conv2_w"], np.float32)   # (20, 6, 3, 3)
    c2b = np.asarray(params["conv2_b"], np.float32)   # (20,)
    l1w = np.asarray(params["lin1_w"], np.float32)    # (120, 500)
    l1b = np.asarray(params["lin1_b"], np.float32)
    l2w = np.asarray(params["lin2_w"], np.float32)    # (84, 120)
    l2b = np.asarray(params["lin2_b"], np.float32)
    l3w = np.asarray(params["lin3_w"], np.float32)    # (10, 84)
    l3b = np.asarray(params["lin3_b"], np.float32)

    # conv1 -> row-Toeplitz matmul weight (5*28, 24*6).
    w1 = np.zeros((5 * 28, 24 * 6), np.float32)
    for dh in range(5):
        for dw in range(5):
            for ow in range(24):
                w1[dh * 28 + ow + dw, ow * 6:(ow + 1) * 6] = c1w[:, 0, dh, dw]
    b1 = np.tile(c1b, 24)[None, :]                    # (1, 144)

    # conv2 -> Toeplitz weight over the uncompacted pool-1 layout (3*138, 200);
    # rows at junk lane positions stay zero.
    w2 = np.zeros((3 * 138, 10 * 20), np.float32)
    for dh in range(3):
        for dw in range(3):
            for ow in range(10):
                wi = ow + dw
                w2[dh * 138 + 12 * wi:dh * 138 + 12 * wi + 6,
                   ow * 20:(ow + 1) * 20] = c2w[:, :, dh, dw].T   # (ci, co)
    b2 = np.tile(c2b, 10)[None, :]                    # (1, 200)

    # lin1: fold the PyTorch NCHW flatten order (c*25 + h*5 + w) and the
    # uncompacted pool-2 layout (flat lane = q*180 + 40*w + c) into (900, 120).
    w3 = np.zeros((5 * 180, 120), np.float32)
    for c in range(20):
        for q in range(5):
            for w in range(5):
                w3[q * 180 + 40 * w + c, :] = l1w[:, c * 25 + q * 5 + w]

    as_bf16 = lambda a: jnp.asarray(a, jnp.bfloat16)
    as_f32 = lambda a: jnp.asarray(a, jnp.float32)
    return {
        "w1": as_bf16(w1), "b1": as_f32(b1),
        "w2": as_bf16(w2), "b2": as_f32(b2),
        "w3": as_bf16(w3), "b3": as_f32(l1b[None, :]),
        "w4": as_bf16(l2w.T), "b4": as_f32(l2b[None, :]),
        "w5": as_bf16(l3w.T), "b5": as_f32(l3b[None, :]),
    }


# --------------------------- plain-JAX reference ---------------------------- #

def _reference_forward(params, x_nchw):
    x = jnp.transpose(x_nchw, (0, 2, 3, 1)).astype(jnp.float32)   # NHWC

    def conv_relu(x, w, b):            # w: (O, C, KH, KW) PyTorch layout
        o, c, kh, kw = w.shape
        bsz, h, wd, _ = x.shape
        oh, ow = h - kh + 1, wd - kw + 1
        cols = [x[:, dh:dh + oh, dw:dw + ow, :]
                for dh in range(kh) for dw in range(kw)]
        p = jnp.stack(cols, axis=3).reshape(bsz, oh, ow, kh * kw * c)
        wm = jnp.transpose(w, (2, 3, 1, 0)).reshape(kh * kw * c, o)
        return jnp.maximum(p @ wm + b, 0.0)

    def pool(x):
        bsz, h, wd, c = x.shape
        return jnp.max(x.reshape(bsz, h // 2, 2, wd // 2, 2, c), axis=(2, 4))

    y = pool(conv_relu(x, params["conv1_w"], params["conv1_b"]))
    y = pool(conv_relu(y, params["conv2_w"], params["conv2_b"]))
    flat = jnp.transpose(y, (0, 3, 1, 2)).reshape(x.shape[0], -1)   # NCHW order
    a = jnp.maximum(flat @ params["lin1_w"].T + params["lin1_b"], 0.0)
    a = jnp.maximum(a @ params["lin2_w"].T + params["lin2_b"], 0.0)
    return a @ params["lin3_w"].T + params["lin3_b"]


# --------------------------- deterministic params --------------------------- #

def init_params(key):
    ks = jax.random.split(key, 10)

    def u(k, shape, fan_in):
        bound = 1.0 / jnp.sqrt(jnp.float32(fan_in))
        return jax.random.uniform(k, shape, jnp.float32, -bound, bound)

    return {
        "conv1_w": u(ks[0], (6, 1, 5, 5), 1 * 5 * 5),
        "conv1_b": u(ks[1], (6,), 1 * 5 * 5),
        "conv2_w": u(ks[2], (20, 6, 3, 3), 6 * 3 * 3),
        "conv2_b": u(ks[3], (20,), 6 * 3 * 3),
        "lin1_w": u(ks[4], (120, 500), 500),
        "lin1_b": u(ks[5], (120,), 500),
        "lin2_w": u(ks[6], (84, 120), 120),
        "lin2_b": u(ks[7], (84,), 120),
        "lin3_w": u(ks[8], (10, 84), 84),
        "lin3_b": u(ks[9], (10,), 84),
    }


if __name__ == "__main__":
    key = jax.random.PRNGKey(0)
    pkey, xkey = jax.random.split(key)
    params = init_params(pkey)
    packed = pack_params(params)

    # DigitClassifier's FC dims imply a fixed 28x28 single-channel input.
    x = jax.random.normal(xkey, (2, 1, 28, 28), jnp.float32)

    out = digit_classifier_forward(packed, x)
    jax.block_until_ready(out)
    assert out.shape == (2, 10) and out.dtype == jnp.float32

    # Validate against a plain-JAX f32 reference (bf16 MXU operands => tolerance).
    ref = _reference_forward(params, x)
    err = float(jnp.max(jnp.abs(out - ref)))
    assert err < 0.2, f"mismatch vs reference: max abs err = {err}"

    print("KERNEL_OK")
</pallas_src>

<mosaic_0001>
module attributes {stable_mosaic.version = 11 : i64} {
  func.func @_digit_classifier_kernel(%arg0: memref<2x28x28xf32, #tpu.memory_space<vmem>>, %arg1: memref<140x144xbf16, #tpu.memory_space<vmem>>, %arg2: memref<1x144xf32, #tpu.memory_space<vmem>>, %arg3: memref<414x200xbf16, #tpu.memory_space<vmem>>, %arg4: memref<1x200xf32, #tpu.memory_space<vmem>>, %arg5: memref<900x120xbf16, #tpu.memory_space<vmem>>, %arg6: memref<1x120xf32, #tpu.memory_space<vmem>>, %arg7: memref<120x84xbf16, #tpu.memory_space<vmem>>, %arg8: memref<1x84xf32, #tpu.memory_space<vmem>>, %arg9: memref<84x10xbf16, #tpu.memory_space<vmem>>, %arg10: memref<1x10xf32, #tpu.memory_space<vmem>>, %arg11: memref<2x10xf32, #tpu.memory_space<vmem>>) attributes {dimension_semantics = [], scalar_prefetch = 0 : i64, scratch_operands = 0 : i64, tpu.core_type = #tpu.core_type<tc>} {
    %c0 = arith.constant 0 : index
    %c0_0 = arith.constant 0 : index
    %0 = vector.load %arg1[%c0, %c0_0] : memref<140x144xbf16, #tpu.memory_space<vmem>>, vector<140x144xbf16>
    %c0_1 = arith.constant 0 : index
    %c0_2 = arith.constant 0 : index
    %1 = vector.load %arg2[%c0_1, %c0_2] : memref<1x144xf32, #tpu.memory_space<vmem>>, vector<1x144xf32>
    %c0_3 = arith.constant 0 : index
    %c0_4 = arith.constant 0 : index
    %2 = vector.load %arg3[%c0_3, %c0_4] : memref<414x200xbf16, #tpu.memory_space<vmem>>, vector<414x200xbf16>
    %c0_5 = arith.constant 0 : index
    %c0_6 = arith.constant 0 : index
    %3 = vector.load %arg4[%c0_5, %c0_6] : memref<1x200xf32, #tpu.memory_space<vmem>>, vector<1x200xf32>
    %c0_7 = arith.constant 0 : index
    %c0_8 = arith.constant 0 : index
    %c0_9 = arith.constant 0 : index
    %4 = vector.load %arg0[%c0_7, %c0_8, %c0_9] : memref<2x28x28xf32, #tpu.memory_space<vmem>>, vector<2x28x28xf32>
    %5 = vector.extract_strided_slice %4 {offsets = [0, 0, 0], sizes = [1, 28, 28], strides = [1, 1, 1]} : vector<2x28x28xf32> to vector<1x28x28xf32>
    %6 = vector.shape_cast %5 : vector<1x28x28xf32> to vector<28x28xf32>
    %7 = vector.extract_strided_slice %6 {offsets = [0, 0], sizes = [24, 28], strides = [1, 1]} : vector<28x28xf32> to vector<24x28xf32>
    %8 = vector.extract_strided_slice %6 {offsets = [1, 0], sizes = [24, 28], strides = [1, 1]} : vector<28x28xf32> to vector<24x28xf32>
    %9 = vector.extract_strided_slice %6 {offsets = [2, 0], sizes = [24, 28], strides = [1, 1]} : vector<28x28xf32> to vector<24x28xf32>
    %10 = vector.extract_strided_slice %6 {offsets = [3, 0], sizes = [24, 28], strides = [1, 1]} : vector<28x28xf32> to vector<24x28xf32>
    %11 = vector.extract_strided_slice %6 {offsets = [4, 0], sizes = [24, 28], strides = [1, 1]} : vector<28x28xf32> to vector<24x28xf32>
    %12 = tpu.concatenate %7, %8, %9, %10, %11 in 1 : vector<24x28xf32>, vector<24x28xf32>, vector<24x28xf32>, vector<24x28xf32>, vector<24x28xf32> -> vector<24x140xf32>
    %13 = arith.truncf %12 : vector<24x140xf32> to vector<24x140xbf16>
    %cst = arith.constant dense<0.000000e+00> : vector<24x144xf32>
    %14 = tpu.matmul %13, %0, %cst {dimension_numbers = #tpu.dot_dimension_numbers<[1], [0], [0], [1], [0, 0, 1, 1], [], []>} : vector<24x140xbf16>, vector<140x144xbf16>, vector<24x144xf32> -> vector<24x144xf32>
    %15 = vector.broadcast %1 : vector<1x144xf32> to vector<24x144xf32>
    %16 = arith.addf %14, %15 : vector<24x144xf32>
    %cst_10 = arith.constant 0.000000e+00 : f32
    %17 = vector.broadcast %cst_10 : f32 to vector<24x144xf32>
    %18 = arith.maximumf %16, %17 : vector<24x144xf32>
    %19 = vector.extract_strided_slice %18 {offsets = [0, 0], sizes = [23, 144], strides = [1, 1]} : vector<24x144xf32> to vector<23x144xf32>
    %20 = vector.extract_strided_slice %18 {offsets = [1, 0], sizes = [23, 144], strides = [1, 1]} : vector<24x144xf32> to vector<23x144xf32>
    %21 = arith.maximumf %19, %20 : vector<23x144xf32>
    %22 = vector.extract_strided_slice %21 {offsets = [0, 0], sizes = [23, 138], strides = [1, 1]} : vector<23x144xf32> to vector<23x138xf32>
    %23 = vector.extract_strided_slice %21 {offsets = [0, 6], sizes = [23, 138], strides = [1, 1]} : vector<23x144xf32> to vector<23x138xf32>
    %24 = arith.maximumf %22, %23 : vector<23x138xf32>
    %25 = vector.extract_strided_slice %24 {offsets = [0, 0], sizes = [19, 138], strides = [1, 1]} : vector<23x138xf32> to vector<19x138xf32>
    %26 = vector.extract_strided_slice %24 {offsets = [2, 0], sizes = [19, 138], strides = [1, 1]} : vector<23x138xf32> to vector<19x138xf32>
    %27 = vector.extract_strided_slice %24 {offsets = [4, 0], sizes = [19, 138], strides = [1, 1]} : vector<23x138xf32> to vector<19x138xf32>
    %28 = tpu.concatenate %25, %26, %27 in 1 : vector<19x138xf32>, vector<19x138xf32>, vector<19x138xf32> -> vector<19x414xf32>
    %29 = arith.truncf %28 : vector<19x414xf32> to vector<19x414xbf16>
    %cst_11 = arith.constant dense<0.000000e+00> : vector<19x200xf32>
    %30 = tpu.matmul %29, %2, %cst_11 {dimension_numbers = #tpu.dot_dimension_numbers<[1], [0], [0], [1], [0, 0, 1, 1], [], []>} : vector<19x414xbf16>, vector<414x200xbf16>, vector<19x200xf32> -> vector<19x200xf32>
    %31 = vector.broadcast %3 : vector<1x200xf32> to vector<19x200xf32>
    %32 = arith.addf %30, %31 : vector<19x200xf32>
    %cst_12 = arith.constant 0.000000e+00 : f32
    %33 = vector.broadcast %cst_12 : f32 to vector<19x200xf32>
    %34 = arith.maximumf %32, %33 : vector<19x200xf32>
    %35 = vector.extract_strided_slice %34 {offsets = [0, 0], sizes = [17, 200], strides = [1, 1]} : vector<19x200xf32> to vector<17x200xf32>
    %36 = vector.extract_strided_slice %34 {offsets = [2, 0], sizes = [17, 200], strides = [1, 1]} : vector<19x200xf32> to vector<17x200xf32>
    %37 = arith.maximumf %35, %36 : vector<17x200xf32>
    %38 = vector.extract_strided_slice %37 {offsets = [0, 0], sizes = [17, 180], strides = [1, 1]} : vector<17x200xf32> to vector<17x180xf32>
    %39 = vector.extract_strided_slice %37 {offsets = [0, 20], sizes = [17, 180], strides = [1, 1]} : vector<17x200xf32> to vector<17x180xf32>
    %40 = arith.maximumf %38, %39 : vector<17x180xf32>
    %41 = vector.extract_strided_slice %40 {offsets = [0, 0], sizes = [1, 180], strides = [1, 1]} : vector<17x180xf32> to vector<1x180xf32>
    %42 = vector.extract_strided_slice %40 {offsets = [4, 0], sizes = [1, 180], strides = [1, 1]} : vector<17x180xf32> to vector<1x180xf32>
    %43 = vector.extract_strided_slice %40 {offsets = [8, 0], sizes = [1, 180], strides = [1, 1]} : vector<17x180xf32> to vector<1x180xf32>
    %44 = vector.extract_strided_slice %40 {offsets = [12, 0], sizes = [1, 180], strides = [1, 1]} : vector<17x180xf32> to vector<1x180xf32>
    %45 = vector.extract_strided_slice %40 {offsets = [16, 0], sizes = [1, 180], strides = [1, 1]} : vector<17x180xf32> to vector<1x180xf32>
    %46 = tpu.concatenate %41, %42, %43, %44, %45 in 1 : vector<1x180xf32>, vector<1x180xf32>, vector<1x180xf32>, vector<1x180xf32>, vector<1x180xf32> -> vector<1x900xf32>
    %47 = vector.extract_strided_slice %4 {offsets = [1, 0, 0], sizes = [1, 28, 28], strides = [1, 1, 1]} : vector<2x28x28xf32> to vector<1x28x28xf32>
    %48 = vector.shape_cast %47 : vector<1x28x28xf32> to vector<28x28xf32>
    %49 = vector.extract_strided_slice %48 {offsets = [0, 0], sizes = [24, 28], strides = [1, 1]} : vector<28x28xf32> to vector<24x28xf32>
    %50 = vector.extract_strided_slice %48 {offsets = [1, 0], sizes = [24, 28], strides = [1, 1]} : vector<28x28xf32> to vector<24x28xf32>
    %51 = vector.extract_strided_slice %48 {offsets = [2, 0], sizes = [24, 28], strides = [1, 1]} : vector<28x28xf32> to vector<24x28xf32>
    %52 = vector.extract_strided_slice %48 {offsets = [3, 0], sizes = [24, 28], strides = [1, 1]} : vector<28x28xf32> to vector<24x28xf32>
    %53 = vector.extract_strided_slice %48 {offsets = [4, 0], sizes = [24, 28], strides = [1, 1]} : vector<28x28xf32> to vector<24x28xf32>
    %54 = tpu.concatenate %49, %50, %51, %52, %53 in 1 : vector<24x28xf32>, vector<24x28xf32>, vector<24x28xf32>, vector<24x28xf32>, vector<24x28xf32> -> vector<24x140xf32>
    %55 = arith.truncf %54 : vector<24x140xf32> to vector<24x140xbf16>
    %cst_13 = arith.constant dense<0.000000e+00> : vector<24x144xf32>
    %56 = tpu.matmul %55, %0, %cst_13 {dimension_numbers = #tpu.dot_dimension_numbers<[1], [0], [0], [1], [0, 0, 1, 1], [], []>} : vector<24x140xbf16>, vector<140x144xbf16>, vector<24x144xf32> -> vector<24x144xf32>
    %57 = vector.broadcast %1 : vector<1x144xf32> to vector<24x144xf32>
    %58 = arith.addf %56, %57 : vector<24x144xf32>
    %cst_14 = arith.constant 0.000000e+00 : f32
    %59 = vector.broadcast %cst_14 : f32 to vector<24x144xf32>
    %60 = arith.maximumf %58, %59 : vector<24x144xf32>
    %61 = vector.extract_strided_slice %60 {offsets = [0, 0], sizes = [23, 144], strides = [1, 1]} : vector<24x144xf32> to vector<23x144xf32>
    %62 = vector.extract_strided_slice %60 {offsets = [1, 0], sizes = [23, 144], strides = [1, 1]} : vector<24x144xf32> to vector<23x144xf32>
    %63 = arith.maximumf %61, %62 : vector<23x144xf32>
    %64 = vector.extract_strided_slice %63 {offsets = [0, 0], sizes = [23, 138], strides = [1, 1]} : vector<23x144xf32> to vector<23x138xf32>
    %65 = vector.extract_strided_slice %63 {offsets = [0, 6], sizes = [23, 138], strides = [1, 1]} : vector<23x144xf32> to vector<23x138xf32>
    %66 = arith.maximumf %64, %65 : vector<23x138xf32>
    %67 = vector.extract_strided_slice %66 {offsets = [0, 0], sizes = [19, 138], strides = [1, 1]} : vector<23x138xf32> to vector<19x138xf32>
    %68 = vector.extract_strided_slice %66 {offsets = [2, 0], sizes = [19, 138], strides = [1, 1]} : vector<23x138xf32> to vector<19x138xf32>
    %69 = vector.extract_strided_slice %66 {offsets = [4, 0], sizes = [19, 138], strides = [1, 1]} : vector<23x138xf32> to vector<19x138xf32>
    %70 = tpu.concatenate %67, %68, %69 in 1 : vector<19x138xf32>, vector<19x138xf32>, vector<19x138xf32> -> vector<19x414xf32>
    %71 = arith.truncf %70 : vector<19x414xf32> to vector<19x414xbf16>
    %cst_15 = arith.constant dense<0.000000e+00> : vector<19x200xf32>
    %72 = tpu.matmul %71, %2, %cst_15 {dimension_numbers = #tpu.dot_dimension_numbers<[1], [0], [0], [1], [0, 0, 1, 1], [], []>} : vector<19x414xbf16>, vector<414x200xbf16>, vector<19x200xf32> -> vector<19x200xf32>
    %73 = vector.broadcast %3 : vector<1x200xf32> to vector<19x200xf32>
    %74 = arith.addf %72, %73 : vector<19x200xf32>
    %cst_16 = arith.constant 0.000000e+00 : f32
    %75 = vector.broadcast %cst_16 : f32 to vector<19x200xf32>
    %76 = arith.maximumf %74, %75 : vector<19x200xf32>
    %77 = vector.extract_strided_slice %76 {offsets = [0, 0], sizes = [17, 200], strides = [1, 1]} : vector<19x200xf32> to vector<17x200xf32>
    %78 = vector.extract_strided_slice %76 {offsets = [2, 0], sizes = [17, 200], strides = [1, 1]} : vector<19x200xf32> to vector<17x200xf32>
    %79 = arith.maximumf %77, %78 : vector<17x200xf32>
    %80 = vector.extract_strided_slice %79 {offsets = [0, 0], sizes = [17, 180], strides = [1, 1]} : vector<17x200xf32> to vector<17x180xf32>
    %81 = vector.extract_strided_slice %79 {offsets = [0, 20], sizes = [17, 180], strides = [1, 1]} : vector<17x200xf32> to vector<17x180xf32>
    %82 = arith.maximumf %80, %81 : vector<17x180xf32>
    %83 = vector.extract_strided_slice %82 {offsets = [0, 0], sizes = [1, 180], strides = [1, 1]} : vector<17x180xf32> to vector<1x180xf32>
    %84 = vector.extract_strided_slice %82 {offsets = [4, 0], sizes = [1, 180], strides = [1, 1]} : vector<17x180xf32> to vector<1x180xf32>
    %85 = vector.extract_strided_slice %82 {offsets = [8, 0], sizes = [1, 180], strides = [1, 1]} : vector<17x180xf32> to vector<1x180xf32>
    %86 = vector.extract_strided_slice %82 {offsets = [12, 0], sizes = [1, 180], strides = [1, 1]} : vector<17x180xf32> to vector<1x180xf32>
    %87 = vector.extract_strided_slice %82 {offsets = [16, 0], sizes = [1, 180], strides = [1, 1]} : vector<17x180xf32> to vector<1x180xf32>
    %88 = tpu.concatenate %83, %84, %85, %86, %87 in 1 : vector<1x180xf32>, vector<1x180xf32>, vector<1x180xf32>, vector<1x180xf32>, vector<1x180xf32> -> vector<1x900xf32>
    %89 = tpu.concatenate %46, %88 in 0 : vector<1x900xf32>, vector<1x900xf32> -> vector<2x900xf32>
    %c0_17 = arith.constant 0 : index
    %c0_18 = arith.constant 0 : index
    %90 = vector.load %arg5[%c0_17, %c0_18] : memref<900x120xbf16, #tpu.memory_space<vmem>>, vector<900x120xbf16>
    %91 = arith.truncf %89 : vector<2x900xf32> to vector<2x900xbf16>
    %cst_19 = arith.constant dense<0.000000e+00> : vector<2x120xf32>
    %92 = tpu.matmul %91, %90, %cst_19 {dimension_numbers = #tpu.dot_dimension_numbers<[1], [0], [0], [1], [0, 0, 1, 1], [], []>} : vector<2x900xbf16>, vector<900x120xbf16>, vector<2x120xf32> -> vector<2x120xf32>
    %c0_20 = arith.constant 0 : index
    %c0_21 = arith.constant 0 : index
    %93 = vector.load %arg6[%c0_20, %c0_21] : memref<1x120xf32, #tpu.memory_space<vmem>>, vector<1x120xf32>
    %94 = vector.broadcast %93 : vector<1x120xf32> to vector<2x120xf32>
    %95 = arith.addf %92, %94 : vector<2x120xf32>
    %cst_22 = arith.constant 0.000000e+00 : f32
    %96 = vector.broadcast %cst_22 : f32 to vector<2x120xf32>
    %97 = arith.maximumf %95, %96 : vector<2x120xf32>
    %c0_23 = arith.constant 0 : index
    %c0_24 = arith.constant 0 : index
    %98 = vector.load %arg7[%c0_23, %c0_24] : memref<120x84xbf16, #tpu.memory_space<vmem>>, vector<120x84xbf16>
    %99 = arith.truncf %97 : vector<2x120xf32> to vector<2x120xbf16>
    %cst_25 = arith.constant dense<0.000000e+00> : vector<2x84xf32>
    %100 = tpu.matmul %99, %98, %cst_25 {dimension_numbers = #tpu.dot_dimension_numbers<[1], [0], [0], [1], [0, 0, 1, 1], [], []>} : vector<2x120xbf16>, vector<120x84xbf16>, vector<2x84xf32> -> vector<2x84xf32>
    %c0_26 = arith.constant 0 : index
    %c0_27 = arith.constant 0 : index
    %101 = vector.load %arg8[%c0_26, %c0_27] : memref<1x84xf32, #tpu.memory_space<vmem>>, vector<1x84xf32>
    %102 = vector.broadcast %101 : vector<1x84xf32> to vector<2x84xf32>
    %103 = arith.addf %100, %102 : vector<2x84xf32>
    %cst_28 = arith.constant 0.000000e+00 : f32
    %104 = vector.broadcast %cst_28 : f32 to vector<2x84xf32>
    %105 = arith.maximumf %103, %104 : vector<2x84xf32>
    %c0_29 = arith.constant 0 : index
    %c0_30 = arith.constant 0 : index
    %106 = vector.load %arg9[%c0_29, %c0_30] : memref<84x10xbf16, #tpu.memory_space<vmem>>, vector<84x10xbf16>
    %107 = arith.truncf %105 : vector<2x84xf32> to vector<2x84xbf16>
    %cst_31 = arith.constant dense<0.000000e+00> : vector<2x10xf32>
    %108 = tpu.matmul %107, %106, %cst_31 {dimension_numbers = #tpu.dot_dimension_numbers<[1], [0], [0], [1], [0, 0, 1, 1], [], []>} : vector<2x84xbf16>, vector<84x10xbf16>, vector<2x10xf32> -> vector<2x10xf32>
    %c0_32 = arith.constant 0 : index
    %c0_33 = arith.constant 0 : index
    %109 = vector.load %arg10[%c0_32, %c0_33] : memref<1x10xf32, #tpu.memory_space<vmem>>, vector<1x10xf32>
    %110 = vector.broadcast %109 : vector<1x10xf32> to vector<2x10xf32>
    %111 = arith.addf %108, %110 : vector<2x10xf32>
    %c0_34 = arith.constant 0 : index
    %c0_35 = arith.constant 0 : index
    %112 = vector.load %arg11[%c0_34, %c0_35] : memref<2x10xf32, #tpu.memory_space<vmem>>, vector<2x10xf32>
    tpu.vector_store %arg11[%c0_34, %c0_35], %111 {strides = array<i32>} : memref<2x10xf32, #tpu.memory_space<vmem>>, vector<2x10xf32>,
    return
  }
}

</mosaic_0001>

<llo_original>
// kernel: digit_classifier_forward.1
$region0: #{digit_classifier_forward.1}
  #allocation0 [shape = 'u32[]', space=smem, size = 0x4, offset = 0x4, fixed_abs, tag = 'smem constant byte address 0x4 - core index']
  #allocation1 [shape = 'u32[72,128]{1,0:T(1,128)}', space=vmem, size = 0x9000, scoped, tag = 'internal scratch']
  %s0 = inlined_call_operand.vmem [shape: f32[2,28,28], index: 0, kind: input, shape index: {}]
  %s1 = inlined_call_operand.vmem [shape: bf16[140,144], index: 1, kind: input, shape index: {}]
  %s2 = inlined_call_operand.vmem [shape: f32[1,144], index: 2, kind: input, shape index: {}]
  %s3 = inlined_call_operand.vmem [shape: bf16[414,200], index: 3, kind: input, shape index: {}]
  %s4 = inlined_call_operand.vmem [shape: f32[1,200], index: 4, kind: input, shape index: {}]
  %s5 = inlined_call_operand.vmem [shape: bf16[900,120], index: 5, kind: input, shape index: {}]
  %s6 = inlined_call_operand.vmem [shape: f32[1,120], index: 6, kind: input, shape index: {}]
  %s7 = inlined_call_operand.vmem [shape: bf16[120,84], index: 7, kind: input, shape index: {}]
  %s8 = inlined_call_operand.vmem [shape: f32[1,84], index: 8, kind: input, shape index: {}]
  %s9 = inlined_call_operand.vmem [shape: bf16[84,10], index: 9, kind: input, shape index: {}]
  %s10 = inlined_call_operand.vmem [shape: f32[1,10], index: 10, kind: input, shape index: {}]
  %s11 = inlined_call_operand.hbm [shape: f32[2,10], index: 11, kind: output, shape index: {}]
  %s12 = sld [smem:[#allocation0]]
  $region54: #{digit_classifier_forward.1} parent=0
    _
  %s14 = ssub.s32 1, %s12
  %s15 = scalar_select 0, %s14, %s12
  $region1: #{digit_classifier_forward.1} parent=0
    #allocation2 [shape = 'u8[1024]{0}', space=vmem, size = 0x400, scoped, tag = 'output window, operand 0, single buffered']
    #allocation3 [shape = 's32[1]{0}', space=sflag, size = 0x4, scoped, tag = 'scoped memory for digit_classifier_forward.1']
    %16 = vsyncpa [#allocation3], 0
    // Predicated region
    $region2: #{digit_classifier_forward.1} parent=1 // pred_check
      _
    $region3: #{digit_classifier_forward.1} parent=1 // pred_check_branch
      %18 = sbr.rel (0) target = $region5
    $region4: #{digit_classifier_forward.1} parent=1 // pred_region
      _
    $region5: #{digit_classifier_forward.1} parent=1 // pred_fallthru
      _
    // Predicated region
    $region6: #{digit_classifier_forward.1} parent=1 // pred_check
      _
    $region7: #{digit_classifier_forward.1} parent=1 // pred_check_branch
      %20 = sbr.rel (0) target = $region9
    $region8: #{digit_classifier_forward.1} parent=1 // pred_region
      _
    $region9: #{digit_classifier_forward.1} parent=1 // pred_fallthru
      _
    // Predicated region
    $region10: #{digit_classifier_forward.1} parent=1 // pred_check
      _
    $region11: #{digit_classifier_forward.1} parent=1 // pred_check_branch
      %22 = sbr.rel (0) target = $region13
    $region12: #{digit_classifier_forward.1} parent=1 // pred_region
      _
    $region13: #{digit_classifier_forward.1} parent=1 // pred_fallthru
      _
    // Predicated region
    $region14: #{digit_classifier_forward.1} parent=1 // pred_check
      _
    $region15: #{digit_classifier_forward.1} parent=1 // pred_check_branch
      %24 = sbr.rel (0) target = $region17
    $region16: #{digit_classifier_forward.1} parent=1 // pred_region
      _
    $region17: #{digit_classifier_forward.1} parent=1 // pred_fallthru
      _
    // Predicated region
    $region18: #{digit_classifier_forward.1} parent=1 // pred_check
      _
    $region19: #{digit_classifier_forward.1} parent=1 // pred_check_branch
      %26 = sbr.rel (0) target = $region21
    $region20: #{digit_classifier_forward.1} parent=1 // pred_region
      _
    $region21: #{digit_classifier_forward.1} parent=1 // pred_fallthru
      _
    // Predicated region
    $region22: #{digit_classifier_forward.1} parent=1 // pred_check
      _
    $region23: #{digit_classifier_forward.1} parent=1 // pred_check_branch
      %28 = sbr.rel (0) target = $region25
    $region24: #{digit_classifier_forward.1} parent=1 // pred_region
      _
    $region25: #{digit_classifier_forward.1} parent=1 // pred_fallthru
      _
    // Predicated region
    $region26: #{digit_classifier_forward.1} parent=1 // pred_check
      _
    $region27: #{digit_classifier_forward.1} parent=1 // pred_check_branch
      %30 = sbr.rel (0) target = $region29
    $region28: #{digit_classifier_forward.1} parent=1 // pred_region
      _
    $region29: #{digit_classifier_forward.1} parent=1 // pred_fallthru
      _
    // Predicated region
    $region30: #{digit_classifier_forward.1} parent=1 // pred_check
      _
    $region31: #{digit_classifier_forward.1} parent=1 // pred_check_branch
      %32 = sbr.rel (0) target = $region33
    $region32: #{digit_classifier_forward.1} parent=1 // pred_region
      _
    $region33: #{digit_classifier_forward.1} parent=1 // pred_fallthru
      _
    // Predicated region
    $region34: #{digit_classifier_forward.1} parent=1 // pred_check
      _
    $region35: #{digit_classifier_forward.1} parent=1 // pred_check_branch
      %34 = sbr.rel (0) target = $region37
    $region36: #{digit_classifier_forward.1} parent=1 // pred_region
      _
    $region37: #{digit_classifier_forward.1} parent=1 // pred_fallthru
      _
    // Predicated region
    $region38: #{digit_classifier_forward.1} parent=1 // pred_check
      _
    $region39: #{digit_classifier_forward.1} parent=1 // pred_check_branch
      %36 = sbr.rel (0) target = $region41
    $region40: #{digit_classifier_forward.1} parent=1 // pred_region
      _
    $region41: #{digit_classifier_forward.1} parent=1 // pred_fallthru
      _
    // Predicated region
    $region42: #{digit_classifier_forward.1} parent=1 // pred_check
      _
    $region43: #{digit_classifier_forward.1} parent=1 // pred_check_branch
      %38 = sbr.rel (0) target = $region45
    $region44: #{digit_classifier_forward.1} parent=1 // pred_region
      _
    $region45: #{digit_classifier_forward.1} parent=1 // pred_fallthru
      _
    %v40 = vld [vmem:[%s1] sm:$0xff]
    %v41 = vld [vmem:[%s1 + $0x8] sm:$0xff]
    %v42 = vld [vmem:[%s1 + $0x10] sm:$0xff]
    %v43 = vld [vmem:[%s1 + $0x18] sm:$0xff]
    %v44 = vld [vmem:[%s1 + $0x20] sm:$0xff]
    %v45 = vld [vmem:[%s1 + $0x28] sm:$0xff]
    %v46 = vld [vmem:[%s1 + $0x30] sm:$0xff]
    %v47 = vld [vmem:[%s1 + $0x38] sm:$0xff]
    %v48 = vld [vmem:[%s1 + $0x40] sm:$0xff]
    %v49 = vld [vmem:[%s1 + $0x48] sm:$0xff]
    %v50 = vld [vmem:[%s1 + $0x50] sm:$0xff]
    %v51 = vld [vmem:[%s1 + $0x58] sm:$0xff]
    %v52 = vld [vmem:[%s1 + $0x60] sm:$0xff]
    %v53 = vld [vmem:[%s1 + $0x68] sm:$0xff]
    %v54 = vld [vmem:[%s1 + $0x70] sm:$0xff]
    %v55 = vld [vmem:[%s1 + $0x78] sm:$0xff]
    %v56 = vld [vmem:[%s1 + $0x80] sm:$0xff]
    %v57 = vld [vmem:[%s1 + $0x88] sm:$0x33]
    %v58 = vld [vmem:[%s2] sm:$0x3]
    %v59 = vld [vmem:[%s3] sm:$0xff]
    %v60 = vld [vmem:[%s3 + $0x8] sm:$0xff]
    %v61 = vld [vmem:[%s3 + $0x10] sm:$0xff]
    %v62 = vld [vmem:[%s3 + $0x18] sm:$0xff]
    %v63 = vld [vmem:[%s3 + $0x20] sm:$0xff]
    %v64 = vld [vmem:[%s3 + $0x28] sm:$0xff]
    %v65 = vld [vmem:[%s3 + $0x30] sm:$0xff]
    %v66 = vld [vmem:[%s3 + $0x38] sm:$0xff]
    %v67 = vld [vmem:[%s3 + $0x40] sm:$0xff]
    %v68 = vld [vmem:[%s3 + $0x48] sm:$0xff]
    %v69 = vld [vmem:[%s3 + $0x50] sm:$0xff]
    %v70 = vld [vmem:[%s3 + $0x58] sm:$0xff]
    %v71 = vld [vmem:[%s3 + $0x60] sm:$0xff]
    %v72 = vld [vmem:[%s3 + $0x68] sm:$0xff]
    %v73 = vld [vmem:[%s3 + $0x70] sm:$0xff]
    %v74 = vld [vmem:[%s3 + $0x78] sm:$0xff]
    %v75 = vld [vmem:[%s3 + $0x80] sm:$0xff]
    %v76 = vld [vmem:[%s3 + $0x88] sm:$0xff]
    %v77 = vld [vmem:[%s3 + $0x90] sm:$0xff]
    %v78 = vld [vmem:[%s3 + $0x98] sm:$0xff]
    %v79 = vld [vmem:[%s3 + $0xa0] sm:$0xff]
    %v80 = vld [vmem:[%s3 + $0xa8] sm:$0xff]
    %v81 = vld [vmem:[%s3 + $0xb0] sm:$0xff]
    %v82 = vld [vmem:[%s3 + $0xb8] sm:$0xff]
    %v83 = vld [vmem:[%s3 + $0xc0] sm:$0xff]
    %v84 = vld [vmem:[%s3 + $0xc8] sm:$0xff]
    %v85 = vld [vmem:[%s3 + $0xd0] sm:$0xff]
    %v86 = vld [vmem:[%s3 + $0xd8] sm:$0xff]
    %v87 = vld [vmem:[%s3 + $0xe0] sm:$0xff]
    %v88 = vld [vmem:[%s3 + $0xe8] sm:$0xff]
    %v89 = vld [vmem:[%s3 + $0xf0] sm:$0xff]
    %v90 = vld [vmem:[%s3 + $0xf8] sm:$0xff]
    %v91 = vld [vmem:[%s3 + $0x100] sm:$0xff]
    %v92 = vld [vmem:[%s3 + $0x108] sm:$0xff]
    %v93 = vld [vmem:[%s3 + $0x110] sm:$0xff]
    %v94 = vld [vmem:[%s3 + $0x118] sm:$0xff]
    %v95 = vld [vmem:[%s3 + $0x120] sm:$0xff]
    %v96 = vld [vmem:[%s3 + $0x128] sm:$0xff]
    %v97 = vld [vmem:[%s3 + $0x130] sm:$0xff]
    %v98 = vld [vmem:[%s3 + $0x138] sm:$0xff]
    %v99 = vld [vmem:[%s3 + $0x140] sm:$0xff]
    %v100 = vld [vmem:[%s3 + $0x148] sm:$0xff]
    %v101 = vld [vmem:[%s3 + $0x150] sm:$0xff]
    %v102 = vld [vmem:[%s3 + $0x158] sm:$0xff]
    %v103 = vld [vmem:[%s3 + $0x160] sm:$0xff]
    %v104 = vld [vmem:[%s3 + $0x168] sm:$0xff]
    %v105 = vld [vmem:[%s3 + $0x170] sm:$0xff]
    %v106 = vld [vmem:[%s3 + $0x178] sm:$0xff]
    %v107 = vld [vmem:[%s3 + $0x180] sm:$0xff]
    %v108 = vld [vmem:[%s3 + $0x188] sm:$0xff]
    %v109 = vld [vmem:[%s3 + $0x190] sm:$0xff]
    %v110 = vld [vmem:[%s3 + $0x198] sm:$0x77]
    %v111 = vld [vmem:[%s4] sm:$0x3]
    %v112 = vld [vmem:[%s0] sm:$0xff]
    %v113 = vld [vmem:[%s0 + $0x8] sm:$0xff]
    %v114 = vld [vmem:[%s0 + $0x10] sm:$0xff]
    %v115 = vld [vmem:[%s0 + $0x18] sm:$0xf]
    %v116 = vld [vmem:[%s0 + $0x20] sm:$0xff]
    %v117 = vld [vmem:[%s0 + $0x28] sm:$0xff]
    %v118 = vld [vmem:[%s0 + $0x30] sm:$0xff]
    %v119 = vld [vmem:[%s0 + $0x38] sm:$0xf]
    %vm124 = vcmask 1046528
    %v125 = vrot.slane %v112, 1
    %v126 = vrot.slane %v113, 1
    %v127 = vsel %vm124, %v125, %v126
    %v128 = vrot.slane %v114, 1
    %v129 = vsel %vm124, %v126, %v128
    %v130 = vrot.slane %v115, 1
    %v131 = vsel %vm124, %v128, %v130
    %132 = vrot.lane.b32.xlu0 %v127, 28
    %v133 = vpop.permute.xlu0 %132
    %134 = vrot.lane.b32.xlu0 %v129, 28
    %v135 = vpop.permute.xlu0 %134
    %136 = vrot.lane.b32.xlu0 %v131, 28
    %v137 = vpop.permute.xlu0 %136
    %vm141 = vcmask 1045504
    %v142 = vrot.slane %v112, 2
    %v143 = vrot.slane %v113, 2
    %v144 = vsel %vm141, %v142, %v143
    %v145 = vrot.slane %v114, 2
    %v146 = vsel %vm141, %v143, %v145
    %v147 = vrot.slane %v115, 2
    %v148 = vsel %vm141, %v145, %v147
    %149 = vrot.lane.b32.xlu0 %v144, 56
    %v150 = vpop.permute.xlu0 %149
    %151 = vrot.lane.b32.xlu0 %v146, 56
    %v152 = vpop.permute.xlu0 %151
    %153 = vrot.lane.b32.xlu0 %v148, 56
    %v154 = vpop.permute.xlu0 %153
    %vm158 = vcmask 1044480
    %v159 = vrot.slane %v112, 3
    %v160 = vrot.slane %v113, 3
    %v161 = vsel %vm158, %v159, %v160
    %v162 = vrot.slane %v114, 3
    %v163 = vsel %vm158, %v160, %v162
    %v164 = vrot.slane %v115, 3
    %v165 = vsel %vm158, %v162, %v164
    %166 = vrot.lane.b32.xlu0 %v161, 84
    %v167 = vpop.permute.xlu0 %166
    %168 = vrot.lane.b32.xlu0 %v163, 84
    %v169 = vpop.permute.xlu0 %168
    %170 = vrot.lane.b32.xlu0 %v165, 84
    %v171 = vpop.permute.xlu0 %170
    %vm175 = vcmask 1043456
    %v176 = vrot.slane %v112, 4
    %v177 = vrot.slane %v113, 4
    %v178 = vsel %vm175, %v176, %v177
    %v179 = vrot.slane %v114, 4
    %v180 = vsel %vm175, %v177, %v179
    %v181 = vrot.slane %v115, 4
    %v182 = vsel %vm175, %v179, %v181
    %183 = vrot.lane.b32.xlu0 %v178, 112
    %v184 = vpop.permute.xlu0 %183
    %185 = vrot.lane.b32.xlu0 %v180, 112
    %v186 = vpop.permute.xlu0 %185
    %187 = vrot.lane.b32.xlu0 %v182, 112
    %v188 = vpop.permute.xlu0 %187
    %vm192 = vcmask 228352
    %v193 = vsel %vm192, %v112, %v133
    %v194 = vsel %vm192, %v113, %v135
    %v195 = vsel %vm192, %v114, %v137
    %vm196 = vcmask 457728
    %v197 = vsel %vm196, %v193, %v150
    %v198 = vsel %vm196, %v194, %v152
    %v199 = vsel %vm196, %v195, %v154
    %vm200 = vcmask 687104
    %v201 = vsel %vm200, %v197, %v167
    %v202 = vsel %vm200, %v198, %v169
    %v203 = vsel %vm200, %v199, %v171
    %vm204 = vcmask 916480
    %v205 = vsel %vm204, %v201, %v184
    %v206 = vsel %vm204, %v202, %v186
    %v207 = vsel %vm204, %v203, %v188
    %v208 = vpack.c.bf16 %v206, %v205
    %v209 = vpack.c.bf16 %v186, %v184
    %v210 = vpack.c.bf16 %v207, %v207
    %v211 = vpack.c.bf16 %v188, %v188
    %v213 = vperm.slane %v58, 0
    %v214 = vperm.slane %v58, 1
    %v235 = vunpack.c.l.b16 %v40
    %v236 = vunpack.c.h.b16 %v40
    %v237 = vunpack.c.l.b16 %v41
    %v238 = vunpack.c.h.b16 %v41
    %v239 = vunpack.c.l.b16 %v42
    %v240 = vunpack.c.h.b16 %v42
    %v241 = vunpack.c.l.b16 %v43
    %v242 = vunpack.c.h.b16 %v43
    %v243 = vunpack.c.l.b16 %v44
    %v244 = vunpack.c.h.b16 %v44
    %v245 = vunpack.c.l.b16 %v45
    %v246 = vunpack.c.h.b16 %v45
    %v247 = vunpack.c.l.b16 %v46
    %v248 = vunpack.c.h.b16 %v46
    %v249 = vunpack.c.l.b16 %v47
    %v250 = vunpack.c.h.b16 %v47
    %v251 = vunpack.c.l.b16 %v48
    %v252 = vunpack.c.h.b16 %v48
    %v253 = vunpack.c.l.b16 %v49
    %v254 = vunpack.c.h.b16 %v49
    %v255 = vunpack.c.l.b16 %v50
    %v256 = vunpack.c.h.b16 %v50
    %v257 = vunpack.c.l.b16 %v51
    %v258 = vunpack.c.h.b16 %v51
    %v259 = vunpack.c.l.b16 %v52
    %v260 = vunpack.c.h.b16 %v52
    %v261 = vunpack.c.l.b16 %v53
    %v262 = vunpack.c.h.b16 %v53
    %v263 = vunpack.c.l.b16 %v54
    %v264 = vunpack.c.h.b16 %v54
    %v265 = vunpack.c.l.b16 %v55
    %v266 = vunpack.c.h.b16 %v55
    %v267 = vunpack.c.l.b16 %v56
    %v268 = vunpack.c.h.b16 %v56
    %v269 = vunpack.c.l.b16 %v57
    %v270 = vunpack.c.h.b16 %v57
    %v271 = vpack.c.b16 %v237, %v235
    %v272 = vpack.c.b16 %v238, %v236
    %v273 = vpack.c.b16 %v241, %v239
    %v274 = vpack.c.b16 %v242, %v240
    %v275 = vpack.c.b16 %v245, %v243
    %v276 = vpack.c.b16 %v246, %v244
    %v277 = vpack.c.b16 %v249, %v247
    %v278 = vpack.c.b16 %v250, %v248
    %v279 = vpack.c.b16 %v253, %v251
    %v280 = vpack.c.b16 %v254, %v252
    %v281 = vpack.c.b16 %v257, %v255
    %v282 = vpack.c.b16 %v258, %v256
    %v283 = vpack.c.b16 %v261, %v259
    %v284 = vpack.c.b16 %v262, %v260
    %v285 = vpack.c.b16 %v265, %v263
    %v286 = vpack.c.b16 %v266, %v264
    %v287 = vpack.c.b16 %v269, %v267
    %v288 = vpack.c.b16 %v270, %v268
    %vm305 = vcmask 97280
    %v307 = vsel %vm305, %v209, 0
    %v310 = vsel %vm305, %v211, 0
    %v313 = vsel %vm141, %v287, 0
    %v316 = vsel %vm141, %v288, 0
    %318 = vmatpush.bf16.msra.mxu0 %v285
    %319 = vmatpush.bf16.msra.mxu0 %v283
    %320 = vmatpush.bf16.msra.mxu0 %v281
    %321 = vmatpush.bf16.msra.mxu0 %v279
    %322 = vmatpush.bf16.msra.mxu0 %v277
    %323 = vmatpush.bf16.msra.mxu0 %v275
    %324 = vmatpush.bf16.msra.mxu0 %v273
    %325 = vmatpush.bf16.msra.mxu0 %v271
    %326 = vmatmul.bf16.gmra.mxu0 %v208
    %v327 = vpop.f32.mrf.mxu0
    %v328 = vadd.f32 %v213, %v327
    %v329 = vpop.f32.mrf.mxu0
    %v330 = vadd.f32 %v213, %v329
    %331 = vmatmul.bf16.gmra.mxu0 %v210
    %v332 = vpop.f32.mrf.mxu0
    %v333 = vadd.f32 %v213, %v332
    %v334 = vpop.f32.mrf.mxu0
    %335 = vdwg.mxu0
    %336 = vmatpush.bf16.msra.mxu0 0
    %337 = vmatpush.bf16.msra.mxu0 0
    %338 = vmatpush.bf16.msra.mxu0 0
    %339 = vmatpush.bf16.msra.mxu0 0
    %340 = vmatpush.bf16.msra.mxu0 0
    %341 = vmatpush.bf16.msra.mxu0 0
    %342 = vmatpush.bf16.msra.mxu0 0
    %343 = vmatpush.bf16.msra.mxu0 %v313
    %344 = vmatmul.bf16.gmra.mxu0 %v307
    %v345 = vpop.f32.mrf.mxu0
    %v346 = vadd.f32 %v328, %v345
    %v347 = vpop.f32.mrf.mxu0
    %v348 = vadd.f32 %v330, %v347
    %349 = vmatmul.bf16.gmra.mxu0 %v310
    %v350 = vpop.f32.mrf.mxu0
    %v351 = vadd.f32 %v333, %v350
    %v352 = vpop.f32.mrf.mxu0
    %353 = vdwg.mxu0
    %354 = vmatpush.bf16.msra.mxu0 %v286
    %355 = vmatpush.bf16.msra.mxu0 %v284
    %356 = vmatpush.bf16.msra.mxu0 %v282
    %357 = vmatpush.bf16.msra.mxu0 %v280
    %358 = vmatpush.bf16.msra.mxu0 %v278
    %359 = vmatpush.bf16.msra.mxu0 %v276
    %360 = vmatpush.bf16.msra.mxu0 %v274
    %361 = vmatpush.bf16.msra.mxu0 %v272
    %362 = vmatmul.bf16.gmra.mxu0 %v208
    %v363 = vpop.f32.mrf.mxu0
    %v364 = vadd.f32 %v214, %v363
    %v365 = vpop.f32.mrf.mxu0
    %v366 = vadd.f32 %v214, %v365
    %367 = vmatmul.bf16.gmra.mxu0 %v210
    %v368 = vpop.f32.mrf.mxu0
    %v369 = vadd.f32 %v214, %v368
    %v370 = vpop.f32.mrf.mxu0
    %371 = vdwg.mxu0
    %372 = vmatpush.bf16.msra.mxu0 0
    %373 = vmatpush.bf16.msra.mxu0 0
    %374 = vmatpush.bf16.msra.mxu0 0
    %375 = vmatpush.bf16.msra.mxu0 0
    %376 = vmatpush.bf16.msra.mxu0 0
    %377 = vmatpush.bf16.msra.mxu0 0
    %378 = vmatpush.bf16.msra.mxu0 0
    %379 = vmatpush.bf16.msra.mxu0 %v316
    %380 = vmatmul.bf16.gmra.mxu0 %v307
    %v381 = vpop.f32.mrf.mxu0
    %v382 = vadd.f32 %v364, %v381
    %v383 = vpop.f32.mrf.mxu0
    %v384 = vadd.f32 %v366, %v383
    %385 = vmatmul.bf16.gmra.mxu0 %v310
    %v386 = vpop.f32.mrf.mxu0
    %v387 = vadd.f32 %v369, %v386
    %v388 = vpop.f32.mrf.mxu0
    %389 = vdwg.mxu0
    %v390 = vmax.f32 %v346, 0.0
    %v391 = vmax.f32 %v382, 0.0
    %v392 = vmax.f32 %v348, 0.0
    %v393 = vmax.f32 %v384, 0.0
    %v394 = vmax.f32 %v351, 0.0
    %v395 = vmax.f32 %v387, 0.0
    %v402 = vrot.slane %v390, 1
    %v403 = vrot.slane %v392, 1
    %v404 = vsel %vm124, %v402, %v403
    %v405 = vrot.slane %v391, 1
    %v406 = vrot.slane %v393, 1
    %v407 = vsel %vm124, %v405, %v406
    %v408 = vrot.slane %v394, 1
    %v409 = vsel %vm124, %v403, %v408
    %v410 = vrot.slane %v395, 1
    %v411 = vsel %vm124, %v406, %v410
    %v418 = vmax.f32 %v390, %v404
    %v419 = vmax.f32 %v391, %v407
    %v420 = vmax.f32 %v392, %v409
    %v421 = vmax.f32 %v393, %v411
    %v422 = vmax.f32 %v394, %v408
    %v423 = vmax.f32 %v395, %v410
    %430 = vrot.lane.b32.xlu0 %v418, 122
    %v431 = vpop.permute.xlu0 %430
    %432 = vrot.lane.b32.xlu0 %v419, 122
    %v433 = vpop.permute.xlu0 %432
    %434 = vrot.lane.b32.xlu0 %v420, 122
    %v435 = vpop.permute.xlu0 %434
    %436 = vrot.lane.b32.xlu0 %v421, 122
    %v437 = vpop.permute.xlu0 %436
    %438 = vrot.lane.b32.xlu0 %v422, 122
    %v439 = vpop.permute.xlu0 %438
    %440 = vrot.lane.b32.xlu0 %v423, 122
    %v441 = vpop.permute.xlu0 %440
    %vm442 = vcmask 998400
    %v443 = vsel %vm442, %v431, %v433
    %v444 = vsel %vm442, %v435, %v437
    %v445 = vsel %vm442, %v439, %v441
    %v452 = vmax.f32 %v418, %v443
    %v453 = vmax.f32 %v419, %v433
    %v454 = vmax.f32 %v420, %v444
    %v455 = vmax.f32 %v421, %v437
    %v456 = vmax.f32 %v422, %v445
    %v457 = vmax.f32 %v423, %v441
    %v464 = vrot.slane %v452, 2
    %v465 = vrot.slane %v454, 2
    %v466 = vsel %vm141, %v464, %v465
    %v467 = vrot.slane %v453, 2
    %v468 = vrot.slane %v455, 2
    %v469 = vsel %vm141, %v467, %v468
    %v470 = vrot.slane %v456, 2
    %v471 = vsel %vm141, %v465, %v470
    %v472 = vrot.slane %v457, 2
    %v473 = vsel %vm141, %v468, %v472
    %474 = vrot.lane.b32.xlu0 %v466, 10
    %v475 = vpop.permute.xlu0 %474
    %476 = vrot.lane.b32.xlu0 %v469, 10
    %v477 = vpop.permute.xlu0 %476
    %478 = vrot.lane.b32.xlu0 %v471, 10
    %v479 = vpop.permute.xlu0 %478
    %480 = vrot.lane.b32.xlu0 %v473, 10
    %v481 = vpop.permute.xlu0 %480
    %482 = vrot.lane.b32.xlu0 %v470, 10
    %v483 = vpop.permute.xlu0 %482
    %484 = vrot.lane.b32.xlu0 %v472, 10
    %v485 = vpop.permute.xlu0 %484
    %vm486 = vcmask 80896
    %v487 = vsel %vm486, %v475, %v477
    %v488 = vsel %vm486, %v479, %v481
    %v489 = vsel %vm486, %v483, %v485
    %v496 = vrot.slane %v452, 4
    %v497 = vrot.slane %v454, 4
    %v498 = vsel %vm175, %v496, %v497
    %v499 = vrot.slane %v453, 4
    %v500 = vrot.slane %v455, 4
    %v501 = vsel %vm175, %v499, %v500
    %v502 = vrot.slane %v456, 4
    %v503 = vsel %vm175, %v497, %v502
    %v504 = vrot.slane %v457, 4
    %v505 = vsel %vm175, %v500, %v504
    %506 = vrot.lane.b32.xlu0 %v498, 20
    %v507 = vpop.permute.xlu0 %506
    %508 = vrot.lane.b32.xlu0 %v501, 20
    %v509 = vpop.permute.xlu0 %508
    %510 = vrot.lane.b32.xlu0 %v503, 20
    %v511 = vpop.permute.xlu0 %510
    %512 = vrot.lane.b32.xlu0 %v505, 20
    %v513 = vpop.permute.xlu0 %512
    %514 = vrot.lane.b32.xlu0 %v502, 20
    %v515 = vpop.permute.xlu0 %514
    %516 = vrot.lane.b32.xlu0 %v504, 20
    %v517 = vpop.permute.xlu0 %516
    %vm518 = vcmask 162816
    %v519 = vsel %vm518, %v507, %v509
    %v520 = vsel %vm518, %v511, %v513
    %v521 = vsel %vm518, %v515, %v517
    %v528 = vsel %vm486, %v453, %v475
    %v529 = vsel %vm486, %v455, %v479
    %v530 = vsel %vm486, %v457, %v483
    %v531 = vsel %vm518, %v487, %v507
    %v532 = vsel %vm518, %v488, %v511
    %v533 = vsel %vm518, %v489, %v515
    %v534 = vpack.c.bf16 %v454, %v452
    %v535 = vpack.c.bf16 %v529, %v528
    %v536 = vpack.c.bf16 %v532, %v531
    %v537 = vpack.c.bf16 %v520, %v519
    %v538 = vpack.c.bf16 %v456, %v456
    %v539 = vpack.c.bf16 %v530, %v530
    %v540 = vpack.c.bf16 %v533, %v533
    %v541 = vpack.c.bf16 %v521, %v521
    %v543 = vperm.slane %v111, 0
    %v544 = vperm.slane %v111, 1
    %v599 = vunpack.c.l.b16 %v59
    %v600 = vunpack.c.h.b16 %v59
    %v601 = vunpack.c.l.b16 %v60
    %v602 = vunpack.c.h.b16 %v60
    %v603 = vunpack.c.l.b16 %v61
    %v604 = vunpack.c.h.b16 %v61
    %v605 = vunpack.c.l.b16 %v62
    %v606 = vunpack.c.h.b16 %v62
    %v607 = vunpack.c.l.b16 %v63
    %v608 = vunpack.c.h.b16 %v63
    %v609 = vunpack.c.l.b16 %v64
    %v610 = vunpack.c.h.b16 %v64
    %v611 = vunpack.c.l.b16 %v65
    %v612 = vunpack.c.h.b16 %v65
    %v613 = vunpack.c.l.b16 %v66
    %v614 = vunpack.c.h.b16 %v66
    %v615 = vunpack.c.l.b16 %v67
    %v616 = vunpack.c.h.b16 %v67
    %v617 = vunpack.c.l.b16 %v68
    %v618 = vunpack.c.h.b16 %v68
    %v619 = vunpack.c.l.b16 %v69
    %v620 = vunpack.c.h.b16 %v69
    %v621 = vunpack.c.l.b16 %v70
    %v622 = vunpack.c.h.b16 %v70
    %v623 = vunpack.c.l.b16 %v71
    %v624 = vunpack.c.h.b16 %v71
    %v625 = vunpack.c.l.b16 %v72
    %v626 = vunpack.c.h.b16 %v72
    %v627 = vunpack.c.l.b16 %v73
    %v628 = vunpack.c.h.b16 %v73
    %v629 = vunpack.c.l.b16 %v74
    %v630 = vunpack.c.h.b16 %v74
    %v631 = vunpack.c.l.b16 %v75
    %v632 = vunpack.c.h.b16 %v75
    %v633 = vunpack.c.l.b16 %v76
    %v634 = vunpack.c.h.b16 %v76
    %v635 = vunpack.c.l.b16 %v77
    %v636 = vunpack.c.h.b16 %v77
    %v637 = vunpack.c.l.b16 %v78
    %v638 = vunpack.c.h.b16 %v78
    %v639 = vunpack.c.l.b16 %v79
    %v640 = vunpack.c.h.b16 %v79
    %v641 = vunpack.c.l.b16 %v80
    %v642 = vunpack.c.h.b16 %v80
    %v643 = vunpack.c.l.b16 %v81
    %v644 = vunpack.c.h.b16 %v81
    %v645 = vunpack.c.l.b16 %v82
    %v646 = vunpack.c.h.b16 %v82
    %v647 = vunpack.c.l.b16 %v83
    %v648 = vunpack.c.h.b16 %v83
    %v649 = vunpack.c.l.b16 %v84
    %v650 = vunpack.c.h.b16 %v84
    %v651 = vunpack.c.l.b16 %v85
    %v652 = vunpack.c.h.b16 %v85
    %v653 = vunpack.c.l.b16 %v86
    %v654 = vunpack.c.h.b16 %v86
    %v655 = vunpack.c.l.b16 %v87
    %v656 = vunpack.c.h.b16 %v87
    %v657 = vunpack.c.l.b16 %v88
    %v658 = vunpack.c.h.b16 %v88
    %v659 = vunpack.c.l.b16 %v89
    %v660 = vunpack.c.h.b16 %v89
    %v661 = vunpack.c.l.b16 %v90
    %v662 = vunpack.c.h.b16 %v90
    %v663 = vunpack.c.l.b16 %v91
    %v664 = vunpack.c.h.b16 %v91
    %v665 = vunpack.c.l.b16 %v92
    %v666 = vunpack.c.h.b16 %v92
    %v667 = vunpack.c.l.b16 %v93
    %v668 = vunpack.c.h.b16 %v93
    %v669 = vunpack.c.l.b16 %v94
    %v670 = vunpack.c.h.b16 %v94
    %v671 = vunpack.c.l.b16 %v95
    %v672 = vunpack.c.h.b16 %v95
    %v673 = vunpack.c.l.b16 %v96
    %v674 = vunpack.c.h.b16 %v96
    %v675 = vunpack.c.l.b16 %v97
    %v676 = vunpack.c.h.b16 %v97
    %v677 = vunpack.c.l.b16 %v98
    %v678 = vunpack.c.h.b16 %v98
    %v679 = vunpack.c.l.b16 %v99
    %v680 = vunpack.c.h.b16 %v99
    %v681 = vunpack.c.l.b16 %v100
    %v682 = vunpack.c.h.b16 %v100
    %v683 = vunpack.c.l.b16 %v101
    %v684 = vunpack.c.h.b16 %v101
    %v685 = vunpack.c.l.b16 %v102
    %v686 = vunpack.c.h.b16 %v102
    %v687 = vunpack.c.l.b16 %v103
    %v688 = vunpack.c.h.b16 %v103
    %v689 = vunpack.c.l.b16 %v104
    %v690 = vunpack.c.h.b16 %v104
    %v691 = vunpack.c.l.b16 %v105
    %v692 = vunpack.c.h.b16 %v105
    %v693 = vunpack.c.l.b16 %v106
    %v694 = vunpack.c.h.b16 %v106
    %v695 = vunpack.c.l.b16 %v107
    %v696 = vunpack.c.h.b16 %v107
    %v697 = vunpack.c.l.b16 %v108
    %v698 = vunpack.c.h.b16 %v108
    %v699 = vunpack.c.l.b16 %v109
    %v700 = vunpack.c.h.b16 %v109
    %v701 = vunpack.c.l.b16 %v110
    %v702 = vunpack.c.h.b16 %v110
    %v703 = vpack.c.b16 %v601, %v599
    %v704 = vpack.c.b16 %v602, %v600
    %v705 = vpack.c.b16 %v605, %v603
    %v706 = vpack.c.b16 %v606, %v604
    %v707 = vpack.c.b16 %v609, %v607
    %v708 = vpack.c.b16 %v610, %v608
    %v709 = vpack.c.b16 %v613, %v611
    %v710 = vpack.c.b16 %v614, %v612
    %v711 = vpack.c.b16 %v617, %v615
    %v712 = vpack.c.b16 %v618, %v616
    %v713 = vpack.c.b16 %v621, %v619
    %v714 = vpack.c.b16 %v622, %v620
    %v715 = vpack.c.b16 %v625, %v623
    %v716 = vpack.c.b16 %v626, %v624
    %v717 = vpack.c.b16 %v629, %v627
    %v718 = vpack.c.b16 %v630, %v628
    %v719 = vpack.c.b16 %v633, %v631
    %v720 = vpack.c.b16 %v634, %v632
    %v721 = vpack.c.b16 %v637, %v635
    %v722 = vpack.c.b16 %v638, %v636
    %v723 = vpack.c.b16 %v641, %v639
    %v724 = vpack.c.b16 %v642, %v640
    %v725 = vpack.c.b16 %v645, %v643
    %v726 = vpack.c.b16 %v646, %v644
    %v727 = vpack.c.b16 %v649, %v647
    %v728 = vpack.c.b16 %v650, %v648
    %v729 = vpack.c.b16 %v653, %v651
    %v730 = vpack.c.b16 %v654, %v652
    %v731 = vpack.c.b16 %v657, %v655
    %v732 = vpack.c.b16 %v658, %v656
    %v733 = vpack.c.b16 %v661, %v659
    %v734 = vpack.c.b16 %v662, %v660
    %v735 = vpack.c.b16 %v665, %v663
    %v736 = vpack.c.b16 %v666, %v664
    %v737 = vpack.c.b16 %v669, %v667
    %v738 = vpack.c.b16 %v670, %v668
    %v739 = vpack.c.b16 %v673, %v671
    %v740 = vpack.c.b16 %v674, %v672
    %v741 = vpack.c.b16 %v677, %v675
    %v742 = vpack.c.b16 %v678, %v676
    %v743 = vpack.c.b16 %v681, %v679
    %v744 = vpack.c.b16 %v682, %v680
    %v745 = vpack.c.b16 %v685, %v683
    %v746 = vpack.c.b16 %v686, %v684
    %v747 = vpack.c.b16 %v689, %v687
    %v748 = vpack.c.b16 %v690, %v688
    %v749 = vpack.c.b16 %v693, %v691
    %v750 = vpack.c.b16 %v694, %v692
    %v751 = vpack.c.b16 %v697, %v695
    %v752 = vpack.c.b16 %v698, %v696
    %v753 = vpack.c.b16 %v701, %v699
    %v754 = vpack.c.b16 %v702, %v700
    %vm805 = vcmask 244736
    %v807 = vsel %vm805, %v537, 0
    %v810 = vsel %vm805, %v541, 0
    %v813 = vsel %vm124, %v753, 0
    %v816 = vsel %vm124, %v754, 0
    %818 = vmatpush.bf16.msra.mxu0 %v717
    %819 = vmatpush.bf16.msra.mxu0 %v715
    %820 = vmatpush.bf16.msra.mxu0 %v713
    %821 = vmatpush.bf16.msra.mxu0 %v711
    %822 = vmatpush.bf16.msra.mxu0 %v709
    %823 = vmatpush.bf16.msra.mxu0 %v707
    %824 = vmatpush.bf16.msra.mxu0 %v705
    %825 = vmatpush.bf16.msra.mxu0 %v703
    %826 = vmatmul.bf16.gmra.mxu0 %v534
    %v827 = vpop.f32.mrf.mxu0
    %v828 = vadd.f32 %v543, %v827
    %v829 = vpop.f32.mrf.mxu0
    %v830 = vadd.f32 %v543, %v829
    %831 = vmatmul.bf16.gmra.mxu0 %v538
    %v832 = vpop.f32.mrf.mxu0
    %v833 = vadd.f32 %v543, %v832
    %v834 = vpop.f32.mrf.mxu0
    %835 = vdwg.mxu0
    %836 = vmatpush.bf16.msra.mxu0 %v733
    %837 = vmatpush.bf16.msra.mxu0 %v731
    %838 = vmatpush.bf16.msra.mxu0 %v729
    %839 = vmatpush.bf16.msra.mxu0 %v727
    %840 = vmatpush.bf16.msra.mxu0 %v725
    %841 = vmatpush.bf16.msra.mxu0 %v723
    %842 = vmatpush.bf16.msra.mxu0 %v721
    %843 = vmatpush.bf16.msra.mxu0 %v719
    %844 = vmatmul.bf16.gmra.mxu0 %v535
    %v845 = vpop.f32.mrf.mxu0
    %v846 = vadd.f32 %v828, %v845
    %v847 = vpop.f32.mrf.mxu0
    %v848 = vadd.f32 %v830, %v847
    %849 = vmatmul.bf16.gmra.mxu0 %v539
    %v850 = vpop.f32.mrf.mxu0
    %v851 = vadd.f32 %v833, %v850
    %v852 = vpop.f32.mrf.mxu0
    %853 = vdwg.mxu0
    %854 = vmatpush.bf16.msra.mxu0 %v749
    %855 = vmatpush.bf16.msra.mxu0 %v747
    %856 = vmatpush.bf16.msra.mxu0 %v745
    %857 = vmatpush.bf16.msra.mxu0 %v743
    %858 = vmatpush.bf16.msra.mxu0 %v741
    %859 = vmatpush.bf16.msra.mxu0 %v739
    %860 = vmatpush.bf16.msra.mxu0 %v737
    %861 = vmatpush.bf16.msra.mxu0 %v735
    %862 = vmatmul.bf16.gmra.mxu0 %v536
    %v863 = vpop.f32.mrf.mxu0
    %v864 = vadd.f32 %v846, %v863
    %v865 = vpop.f32.mrf.mxu0
    %v866 = vadd.f32 %v848, %v865
    %867 = vmatmul.bf16.gmra.mxu0 %v540
    %v868 = vpop.f32.mrf.mxu0
    %v869 = vadd.f32 %v851, %v868
    %v870 = vpop.f32.mrf.mxu0
    %871 = vdwg.mxu0
    %872 = vmatpush.bf16.msra.mxu0 0
    %873 = vmatpush.bf16.msra.mxu0 0
    %874 = vmatpush.bf16.msra.mxu0 0
    %875 = vmatpush.bf16.msra.mxu0 0
    %876 = vmatpush.bf16.msra.mxu0 0
    %877 = vmatpush.bf16.msra.mxu0 0
    %878 = vmatpush.bf16.msra.mxu0 %v813
    %879 = vmatpush.bf16.msra.mxu0 %v751
    %880 = vmatmul.bf16.gmra.mxu0 %v807
    %v881 = vpop.f32.mrf.mxu0
    %v882 = vadd.f32 %v864, %v881
    %v883 = vpop.f32.mrf.mxu0
    %v884 = vadd.f32 %v866, %v883
    %885 = vmatmul.bf16.gmra.mxu0 %v810
    %v886 = vpop.f32.mrf.mxu0
    %v887 = vadd.f32 %v869, %v886
    %v888 = vpop.f32.mrf.mxu0
    %889 = vdwg.mxu0
    %890 = vmatpush.bf16.msra.mxu0 %v718
    %891 = vmatpush.bf16.msra.mxu0 %v716
    %892 = vmatpush.bf16.msra.mxu0 %v714
    %893 = vmatpush.bf16.msra.mxu0 %v712
    %894 = vmatpush.bf16.msra.mxu0 %v710
    %895 = vmatpush.bf16.msra.mxu0 %v708
    %896 = vmatpush.bf16.msra.mxu0 %v706
    %897 = vmatpush.bf16.msra.mxu0 %v704
    %898 = vmatmul.bf16.gmra.mxu0 %v534
    %v899 = vpop.f32.mrf.mxu0
    %v900 = vadd.f32 %v544, %v899
    %v901 = vpop.f32.mrf.mxu0
    %v902 = vadd.f32 %v544, %v901
    %903 = vmatmul.bf16.gmra.mxu0 %v538
    %v904 = vpop.f32.mrf.mxu0
    %v905 = vadd.f32 %v544, %v904
    %v906 = vpop.f32.mrf.mxu0
    %907 = vdwg.mxu0
    %908 = vmatpush.bf16.msra.mxu0 %v734
    %909 = vmatpush.bf16.msra.mxu0 %v732
    %910 = vmatpush.bf16.msra.mxu0 %v730
    %911 = vmatpush.bf16.msra.mxu0 %v728
    %912 = vmatpush.bf16.msra.mxu0 %v726
    %913 = vmatpush.bf16.msra.mxu0 %v724
    %914 = vmatpush.bf16.msra.mxu0 %v722
    %915 = vmatpush.bf16.msra.mxu0 %v720
    %916 = vmatmul.bf16.gmra.mxu0 %v535
    %v917 = vpop.f32.mrf.mxu0
    %v918 = vadd.f32 %v900, %v917
    %v919 = vpop.f32.mrf.mxu0
    %v920 = vadd.f32 %v902, %v919
    %921 = vmatmul.bf16.gmra.mxu0 %v539
    %v922 = vpop.f32.mrf.mxu0
    %v923 = vadd.f32 %v905, %v922
    %v924 = vpop.f32.mrf.mxu0
    %925 = vdwg.mxu0
    %926 = vmatpush.bf16.msra.mxu0 %v750
    %927 = vmatpush.bf16.msra.mxu0 %v748
    %928 = vmatpush.bf16.msra.mxu0 %v746
    %929 = vmatpush.bf16.msra.mxu0 %v744
    %930 = vmatpush.bf16.msra.mxu0 %v742
    %931 = vmatpush.bf16.msra.mxu0 %v740
    %932 = vmatpush.bf16.msra.mxu0 %v738
    %933 = vmatpush.bf16.msra.mxu0 %v736
    %934 = vmatmul.bf16.gmra.mxu0 %v536
    %v935 = vpop.f32.mrf.mxu0
    %v936 = vadd.f32 %v918, %v935
    %v937 = vpop.f32.mrf.mxu0
    %v938 = vadd.f32 %v920, %v937
    %939 = vmatmul.bf16.gmra.mxu0 %v540
    %v940 = vpop.f32.mrf.mxu0
    %v941 = vadd.f32 %v923, %v940
    %v942 = vpop.f32.mrf.mxu0
    %943 = vdwg.mxu0
    %944 = vmatpush.bf16.msra.mxu0 0
    %945 = vmatpush.bf16.msra.mxu0 0
    %946 = vmatpush.bf16.msra.mxu0 0
    %947 = vmatpush.bf16.msra.mxu0 0
    %948 = vmatpush.bf16.msra.mxu0 0
    %949 = vmatpush.bf16.msra.mxu0 0
    %950 = vmatpush.bf16.msra.mxu0 %v816
    %951 = vmatpush.bf16.msra.mxu0 %v752
    %952 = vmatmul.bf16.gmra.mxu0 %v807
    %v953 = vpop.f32.mrf.mxu0
    %v954 = vadd.f32 %v936, %v953
    %v955 = vpop.f32.mrf.mxu0
    %v956 = vadd.f32 %v938, %v955
    %957 = vmatmul.bf16.gmra.mxu0 %v810
    %v958 = vpop.f32.mrf.mxu0
    %v959 = vadd.f32 %v941, %v958
    %v960 = vpop.f32.mrf.mxu0
    %961 = vdwg.mxu0
    %v962 = vmax.f32 %v882, 0.0
    %v963 = vmax.f32 %v954, 0.0
    %v964 = vmax.f32 %v884, 0.0
    %v965 = vmax.f32 %v956, 0.0
    %v966 = vmax.f32 %v887, 0.0
    %v967 = vmax.f32 %v959, 0.0
    %v974 = vrot.slane %v962, 2
    %v975 = vrot.slane %v964, 2
    %v976 = vsel %vm141, %v974, %v975
    %v977 = vrot.slane %v963, 2
    %v978 = vrot.slane %v965, 2
    %v979 = vsel %vm141, %v977, %v978
    %v980 = vrot.slane %v966, 2
    %v981 = vsel %vm141, %v975, %v980
    %v982 = vrot.slane %v967, 2
    %v983 = vsel %vm141, %v978, %v982
    %v990 = vmax.f32 %v962, %v976
    %v991 = vmax.f32 %v963, %v979
    %v992 = vmax.f32 %v964, %v981
    %v993 = vmax.f32 %v965, %v983
    %v994 = vmax.f32 %v966, %v980
    %v995 = vmax.f32 %v967, %v982
    %1002 = vrot.lane.b32.xlu0 %v990, 108
    %v1003 = vpop.permute.xlu0 %1002
    %1004 = vrot.lane.b32.xlu0 %v991, 108
    %v1005 = vpop.permute.xlu0 %1004
    %1006 = vrot.lane.b32.xlu0 %v992, 108
    %v1007 = vpop.permute.xlu0 %1006
    %1008 = vrot.lane.b32.xlu0 %v993, 108
    %v1009 = vpop.permute.xlu0 %1008
    %1010 = vrot.lane.b32.xlu0 %v994, 108
    %v1011 = vpop.permute.xlu0 %1010
    %1012 = vrot.lane.b32.xlu0 %v995, 108
    %v1013 = vpop.permute.xlu0 %1012
    %vm1014 = vcmask 883712
    %v1015 = vsel %vm1014, %v1003, %v1005
    %v1016 = vsel %vm1014, %v1007, %v1009
    %v1017 = vsel %vm1014, %v1011, %v1013
    %v1024 = vmax.f32 %v990, %v1015
    %v1025 = vmax.f32 %v991, %v1005
    %v1026 = vmax.f32 %v992, %v1016
    %v1027 = vmax.f32 %v993, %v1009
    %v1028 = vmax.f32 %v994, %v1017
    %v1029 = vmax.f32 %v995, %v1013
    %v1032 = vrot.slane %v1024, 4
    %v1033 = vrot.slane %v1025, 4
    %1034 = vrot.lane.b32.xlu0 %v1032, 52
    %v1035 = vpop.permute.xlu0 %1034
    %1036 = vrot.lane.b32.xlu0 %v1033, 52
    %v1037 = vpop.permute.xlu0 %1036
    %vm1038 = vcmask 424960
    %v1039 = vsel %vm1038, %v1035, %v1037
    %1044 = vrot.lane.b32.xlu0 %v1026, 104
    %v1045 = vpop.permute.xlu0 %1044
    %1046 = vrot.lane.b32.xlu0 %v1027, 104
    %v1047 = vpop.permute.xlu0 %1046
    %vm1048 = vcmask 850944
    %v1049 = vsel %vm1048, %v1045, %v1047
    %v1053 = vrot.slane %v1026, 4
    %v1054 = vrot.slane %v1027, 4
    %1055 = vrot.lane.b32.xlu0 %v1053, 28
    %v1056 = vpop.permute.xlu0 %1055
    %1057 = vrot.lane.b32.xlu0 %v1054, 28
    %v1058 = vpop.permute.xlu0 %1057
    %v1059 = vsel %vm192, %v1056, %v1058
    %1064 = vrot.lane.b32.xlu0 %v1028, 80
    %v1065 = vpop.permute.xlu0 %1064
    %1066 = vrot.lane.b32.xlu0 %v1029, 80
    %v1067 = vpop.permute.xlu0 %1066
    %vm1068 = vcmask 654336
    %v1069 = vsel %vm1068, %v1065, %v1067
    %v1073 = vsel %vm1038, %v1025, %v1035
    %v1074 = vsel %vm1048, %v1039, %v1045
    %v1075 = vsel %vm192, %v1047, %v1056
    %v1076 = vsel %vm1068, %v1059, %v1065
    %v1081 = vrot.slane %v116, 1
    %v1082 = vrot.slane %v117, 1
    %v1083 = vsel %vm124, %v1081, %v1082
    %v1084 = vrot.slane %v118, 1
    %v1085 = vsel %vm124, %v1082, %v1084
    %v1086 = vrot.slane %v119, 1
    %v1087 = vsel %vm124, %v1084, %v1086
    %1088 = vrot.lane.b32.xlu0 %v1083, 28
    %v1089 = vpop.permute.xlu0 %1088
    %1090 = vrot.lane.b32.xlu0 %v1085, 28
    %v1091 = vpop.permute.xlu0 %1090
    %1092 = vrot.lane.b32.xlu0 %v1087, 28
    %v1093 = vpop.permute.xlu0 %1092
    %v1097 = vrot.slane %v116, 2
    %v1098 = vrot.slane %v117, 2
    %v1099 = vsel %vm141, %v1097, %v1098
    %v1100 = vrot.slane %v118, 2
    %v1101 = vsel %vm141, %v1098, %v1100
    %v1102 = vrot.slane %v119, 2
    %v1103 = vsel %vm141, %v1100, %v1102
    %1104 = vrot.lane.b32.xlu0 %v1099, 56
    %v1105 = vpop.permute.xlu0 %1104
    %1106 = vrot.lane.b32.xlu0 %v1101, 56
    %v1107 = vpop.permute.xlu0 %1106
    %1108 = vrot.lane.b32.xlu0 %v1103, 56
    %v1109 = vpop.permute.xlu0 %1108
    %v1113 = vrot.slane %v116, 3
    %v1114 = vrot.slane %v117, 3
    %v1115 = vsel %vm158, %v1113, %v1114
    %v1116 = vrot.slane %v118, 3
    %v1117 = vsel %vm158, %v1114, %v1116
    %v1118 = vrot.slane %v119, 3
    %v1119 = vsel %vm158, %v1116, %v1118
    %1120 = vrot.lane.b32.xlu0 %v1115, 84
    %v1121 = vpop.permute.xlu0 %1120
    %1122 = vrot.lane.b32.xlu0 %v1117, 84
    %v1123 = vpop.permute.xlu0 %1122
    %1124 = vrot.lane.b32.xlu0 %v1119, 84
    %v1125 = vpop.permute.xlu0 %1124
    %v1129 = vrot.slane %v116, 4
    %v1130 = vrot.slane %v117, 4
    %v1131 = vsel %vm175, %v1129, %v1130
    %v1132 = vrot.slane %v118, 4
    %v1133 = vsel %vm175, %v1130, %v1132
    %v1134 = vrot.slane %v119, 4
    %v1135 = vsel %vm175, %v1132, %v1134
    %1136 = vrot.lane.b32.xlu0 %v1131, 112
    %v1137 = vpop.permute.xlu0 %1136
    %1138 = vrot.lane.b32.xlu0 %v1133, 112
    %v1139 = vpop.permute.xlu0 %1138
    %1140 = vrot.lane.b32.xlu0 %v1135, 112
    %v1141 = vpop.permute.xlu0 %1140
    %v1145 = vsel %vm192, %v116, %v1089
    %v1146 = vsel %vm192, %v117, %v1091
    %v1147 = vsel %vm192, %v118, %v1093
    %v1148 = vsel %vm196, %v1145, %v1105
    %v1149 = vsel %vm196, %v1146, %v1107
    %v1150 = vsel %vm196, %v1147, %v1109
    %v1151 = vsel %vm200, %v1148, %v1121
    %v1152 = vsel %vm200, %v1149, %v1123
    %v1153 = vsel %vm200, %v1150, %v1125
    %v1154 = vsel %vm204, %v1151, %v1137
    %v1155 = vsel %vm204, %v1152, %v1139
    %v1156 = vsel %vm204, %v1153, %v1141
    %v1157 = vpack.c.bf16 %v1155, %v1154
    %v1158 = vpack.c.bf16 %v1139, %v1137
    %v1159 = vpack.c.bf16 %v1156, %v1156
    %v1160 = vpack.c.bf16 %v1141, %v1141
    %v1162 = vsel %vm305, %v1158, 0
    %v1165 = vsel %vm305, %v1160, 0
    %1167 = vmatpush.bf16.msra.mxu0 %v285
    %1168 = vmatpush.bf16.msra.mxu0 %v283
    %1169 = vmatpush.bf16.msra.mxu0 %v281
    %1170 = vmatpush.bf16.msra.mxu0 %v279
    %1171 = vmatpush.bf16.msra.mxu0 %v277
    %1172 = vmatpush.bf16.msra.mxu0 %v275
    %1173 = vmatpush.bf16.msra.mxu0 %v273
    %1174 = vmatpush.bf16.msra.mxu0 %v271
    %1175 = vmatmul.bf16.gmra.mxu0 %v1157
    %v1176 = vpop.f32.mrf.mxu0
    %v1177 = vadd.f32 %v213, %v1176
    %v1178 = vpop.f32.mrf.mxu0
    %v1179 = vadd.f32 %v213, %v1178
    %1180 = vmatmul.bf16.gmra.mxu0 %v1159
    %v1181 = vpop.f32.mrf.mxu0
    %v1182 = vadd.f32 %v213, %v1181
    %v1183 = vpop.f32.mrf.mxu0
    %1184 = vdwg.mxu0
    %1185 = vmatpush.bf16.msra.mxu0 0
    %1186 = vmatpush.bf16.msra.mxu0 0
    %1187 = vmatpush.bf16.msra.mxu0 0
    %1188 = vmatpush.bf16.msra.mxu0 0
    %1189 = vmatpush.bf16.msra.mxu0 0
    %1190 = vmatpush.bf16.msra.mxu0 0
    %1191 = vmatpush.bf16.msra.mxu0 0
    %1192 = vmatpush.bf16.msra.mxu0 %v313
    %1193 = vmatmul.bf16.gmra.mxu0 %v1162
    %v1194 = vpop.f32.mrf.mxu0
    %v1195 = vadd.f32 %v1177, %v1194
    %v1196 = vpop.f32.mrf.mxu0
    %v1197 = vadd.f32 %v1179, %v1196
    %1198 = vmatmul.bf16.gmra.mxu0 %v1165
    %v1199 = vpop.f32.mrf.mxu0
    %v1200 = vadd.f32 %v1182, %v1199
    %v1201 = vpop.f32.mrf.mxu0
    %1202 = vdwg.mxu0
    %1203 = vmatpush.bf16.msra.mxu0 %v286
    %1204 = vmatpush.bf16.msra.mxu0 %v284
    %1205 = vmatpush.bf16.msra.mxu0 %v282
    %1206 = vmatpush.bf16.msra.mxu0 %v280
    %1207 = vmatpush.bf16.msra.mxu0 %v278
    %1208 = vmatpush.bf16.msra.mxu0 %v276
    %1209 = vmatpush.bf16.msra.mxu0 %v274
    %1210 = vmatpush.bf16.msra.mxu0 %v272
    %1211 = vmatmul.bf16.gmra.mxu0 %v1157
    %v1212 = vpop.f32.mrf.mxu0
    %v1213 = vadd.f32 %v214, %v1212
    %v1214 = vpop.f32.mrf.mxu0
    %v1215 = vadd.f32 %v214, %v1214
    %1216 = vmatmul.bf16.gmra.mxu0 %v1159
    %v1217 = vpop.f32.mrf.mxu0
    %v1218 = vadd.f32 %v214, %v1217
    %v1219 = vpop.f32.mrf.mxu0
    %1220 = vdwg.mxu0
    %1221 = vmatpush.bf16.msra.mxu0 0
    %1222 = vmatpush.bf16.msra.mxu0 0
    %1223 = vmatpush.bf16.msra.mxu0 0
    %1224 = vmatpush.bf16.msra.mxu0 0
    %1225 = vmatpush.bf16.msra.mxu0 0
    %1226 = vmatpush.bf16.msra.mxu0 0
    %1227 = vmatpush.bf16.msra.mxu0 0
    %1228 = vmatpush.bf16.msra.mxu0 %v316
    %1229 = vmatmul.bf16.gmra.mxu0 %v1162
    %v1230 = vpop.f32.mrf.mxu0
    %v1231 = vadd.f32 %v1213, %v1230
    %v1232 = vpop.f32.mrf.mxu0
    %v1233 = vadd.f32 %v1215, %v1232
    %1234 = vmatmul.bf16.gmra.mxu0 %v1165
    %v1235 = vpop.f32.mrf.mxu0
    %v1236 = vadd.f32 %v1218, %v1235
    %v1237 = vpop.f32.mrf.mxu0
    %1238 = vdwg.mxu0
    %v1239 = vmax.f32 %v1195, 0.0
    %v1240 = vmax.f32 %v1231, 0.0
    %v1241 = vmax.f32 %v1197, 0.0
    %v1242 = vmax.f32 %v1233, 0.0
    %v1243 = vmax.f32 %v1200, 0.0
    %v1244 = vmax.f32 %v1236, 0.0
    %v1251 = vrot.slane %v1239, 1
    %v1252 = vrot.slane %v1241, 1
    %v1253 = vsel %vm124, %v1251, %v1252
    %v1254 = vrot.slane %v1240, 1
    %v1255 = vrot.slane %v1242, 1
    %v1256 = vsel %vm124, %v1254, %v1255
    %v1257 = vrot.slane %v1243, 1
    %v1258 = vsel %vm124, %v1252, %v1257
    %v1259 = vrot.slane %v1244, 1
    %v1260 = vsel %vm124, %v1255, %v1259
    %v1267 = vmax.f32 %v1239, %v1253
    %v1268 = vmax.f32 %v1240, %v1256
    %v1269 = vmax.f32 %v1241, %v1258
    %v1270 = vmax.f32 %v1242, %v1260
    %v1271 = vmax.f32 %v1243, %v1257
    %v1272 = vmax.f32 %v1244, %v1259
    %1279 = vrot.lane.b32.xlu0 %v1267, 122
    %v1280 = vpop.permute.xlu0 %1279
    %1281 = vrot.lane.b32.xlu0 %v1268, 122
    %v1282 = vpop.permute.xlu0 %1281
    %1283 = vrot.lane.b32.xlu0 %v1269, 122
    %v1284 = vpop.permute.xlu0 %1283
    %1285 = vrot.lane.b32.xlu0 %v1270, 122
    %v1286 = vpop.permute.xlu0 %1285
    %1287 = vrot.lane.b32.xlu0 %v1271, 122
    %v1288 = vpop.permute.xlu0 %1287
    %1289 = vrot.lane.b32.xlu0 %v1272, 122
    %v1290 = vpop.permute.xlu0 %1289
    %v1291 = vsel %vm442, %v1280, %v1282
    %v1292 = vsel %vm442, %v1284, %v1286
    %v1293 = vsel %vm442, %v1288, %v1290
    %v1300 = vmax.f32 %v1267, %v1291
    %v1301 = vmax.f32 %v1268, %v1282
    %v1302 = vmax.f32 %v1269, %v1292
    %v1303 = vmax.f32 %v1270, %v1286
    %v1304 = vmax.f32 %v1271, %v1293
    %v1305 = vmax.f32 %v1272, %v1290
    %v1312 = vrot.slane %v1300, 2
    %v1313 = vrot.slane %v1302, 2
    %v1314 = vsel %vm141, %v1312, %v1313
    %v1315 = vrot.slane %v1301, 2
    %v1316 = vrot.slane %v1303, 2
    %v1317 = vsel %vm141, %v1315, %v1316
    %v1318 = vrot.slane %v1304, 2
    %v1319 = vsel %vm141, %v1313, %v1318
    %v1320 = vrot.slane %v1305, 2
    %v1321 = vsel %vm141, %v1316, %v1320
    %1322 = vrot.lane.b32.xlu0 %v1314, 10
    %v1323 = vpop.permute.xlu0 %1322
    %1324 = vrot.lane.b32.xlu0 %v1317, 10
    %v1325 = vpop.permute.xlu0 %1324
    %1326 = vrot.lane.b32.xlu0 %v1319, 10
    %v1327 = vpop.permute.xlu0 %1326
    %1328 = vrot.lane.b32.xlu0 %v1321, 10
    %v1329 = vpop.permute.xlu0 %1328
    %1330 = vrot.lane.b32.xlu0 %v1318, 10
    %v1331 = vpop.permute.xlu0 %1330
    %1332 = vrot.lane.b32.xlu0 %v1320, 10
    %v1333 = vpop.permute.xlu0 %1332
    %v1334 = vsel %vm486, %v1323, %v1325
    %v1335 = vsel %vm486, %v1327, %v1329
    %v1336 = vsel %vm486, %v1331, %v1333
    %v1343 = vrot.slane %v1300, 4
    %v1344 = vrot.slane %v1302, 4
    %v1345 = vsel %vm175, %v1343, %v1344
    %v1346 = vrot.slane %v1301, 4
    %v1347 = vrot.slane %v1303, 4
    %v1348 = vsel %vm175, %v1346, %v1347
    %v1349 = vrot.slane %v1304, 4
    %v1350 = vsel %vm175, %v1344, %v1349
    %v1351 = vrot.slane %v1305, 4
    %v1352 = vsel %vm175, %v1347, %v1351
    %1353 = vrot.lane.b32.xlu0 %v1345, 20
    %v1354 = vpop.permute.xlu0 %1353
    %1355 = vrot.lane.b32.xlu0 %v1348, 20
    %v1356 = vpop.permute.xlu0 %1355
    %1357 = vrot.lane.b32.xlu0 %v1350, 20
    %v1358 = vpop.permute.xlu0 %1357
    %1359 = vrot.lane.b32.xlu0 %v1352, 20
    %v1360 = vpop.permute.xlu0 %1359
    %1361 = vrot.lane.b32.xlu0 %v1349, 20
    %v1362 = vpop.permute.xlu0 %1361
    %1363 = vrot.lane.b32.xlu0 %v1351, 20
    %v1364 = vpop.permute.xlu0 %1363
    %v1365 = vsel %vm518, %v1354, %v1356
    %v1366 = vsel %vm518, %v1358, %v1360
    %v1367 = vsel %vm518, %v1362, %v1364
    %v1374 = vsel %vm486, %v1301, %v1323
    %v1375 = vsel %vm486, %v1303, %v1327
    %v1376 = vsel %vm486, %v1305, %v1331
    %v1377 = vsel %vm518, %v1334, %v1354
    %v1378 = vsel %vm518, %v1335, %v1358
    %v1379 = vsel %vm518, %v1336, %v1362
    %v1380 = vpack.c.bf16 %v1302, %v1300
    %v1381 = vpack.c.bf16 %v1375, %v1374
    %v1382 = vpack.c.bf16 %v1378, %v1377
    %v1383 = vpack.c.bf16 %v1366, %v1365
    %v1384 = vpack.c.bf16 %v1304, %v1304
    %v1385 = vpack.c.bf16 %v1376, %v1376
    %v1386 = vpack.c.bf16 %v1379, %v1379
    %v1387 = vpack.c.bf16 %v1367, %v1367
    %v1389 = vsel %vm805, %v1383, 0
    %v1392 = vsel %vm805, %v1387, 0
    %1394 = vmatpush.bf16.msra.mxu0 %v717
    %1395 = vmatpush.bf16.msra.mxu0 %v715
    %1396 = vmatpush.bf16.msra.mxu0 %v713
    %1397 = vmatpush.bf16.msra.mxu0 %v711
    %1398 = vmatpush.bf16.msra.mxu0 %v709
    %1399 = vmatpush.bf16.msra.mxu0 %v707
    %1400 = vmatpush.bf16.msra.mxu0 %v705
    %1401 = vmatpush.bf16.msra.mxu0 %v703
    %1402 = vmatmul.bf16.gmra.mxu0 %v1380
    %v1403 = vpop.f32.mrf.mxu0
    %v1404 = vadd.f32 %v543, %v1403
    %v1405 = vpop.f32.mrf.mxu0
    %v1406 = vadd.f32 %v543, %v1405
    %1407 = vmatmul.bf16.gmra.mxu0 %v1384
    %v1408 = vpop.f32.mrf.mxu0
    %v1409 = vadd.f32 %v543, %v1408
    %v1410 = vpop.f32.mrf.mxu0
    %1411 = vdwg.mxu0
    %1412 = vmatpush.bf16.msra.mxu0 %v733
    %1413 = vmatpush.bf16.msra.mxu0 %v731
    %1414 = vmatpush.bf16.msra.mxu0 %v729
    %1415 = vmatpush.bf16.msra.mxu0 %v727
    %1416 = vmatpush.bf16.msra.mxu0 %v725
    %1417 = vmatpush.bf16.msra.mxu0 %v723
    %1418 = vmatpush.bf16.msra.mxu0 %v721
    %1419 = vmatpush.bf16.msra.mxu0 %v719
    %1420 = vmatmul.bf16.gmra.mxu0 %v1381
    %v1421 = vpop.f32.mrf.mxu0
    %v1422 = vadd.f32 %v1404, %v1421
    %v1423 = vpop.f32.mrf.mxu0
    %v1424 = vadd.f32 %v1406, %v1423
    %1425 = vmatmul.bf16.gmra.mxu0 %v1385
    %v1426 = vpop.f32.mrf.mxu0
    %v1427 = vadd.f32 %v1409, %v1426
    %v1428 = vpop.f32.mrf.mxu0
    %1429 = vdwg.mxu0
    %1430 = vmatpush.bf16.msra.mxu0 %v749
    %1431 = vmatpush.bf16.msra.mxu0 %v747
    %1432 = vmatpush.bf16.msra.mxu0 %v745
    %1433 = vmatpush.bf16.msra.mxu0 %v743
    %1434 = vmatpush.bf16.msra.mxu0 %v741
    %1435 = vmatpush.bf16.msra.mxu0 %v739
    %1436 = vmatpush.bf16.msra.mxu0 %v737
    %1437 = vmatpush.bf16.msra.mxu0 %v735
    %1438 = vmatmul.bf16.gmra.mxu0 %v1382
    %v1439 = vpop.f32.mrf.mxu0
    %v1440 = vadd.f32 %v1422, %v1439
    %v1441 = vpop.f32.mrf.mxu0
    %v1442 = vadd.f32 %v1424, %v1441
    %1443 = vmatmul.bf16.gmra.mxu0 %v1386
    %v1444 = vpop.f32.mrf.mxu0
    %v1445 = vadd.f32 %v1427, %v1444
    %v1446 = vpop.f32.mrf.mxu0
    %1447 = vdwg.mxu0
    %1448 = vmatpush.bf16.msra.mxu0 0
    %1449 = vmatpush.bf16.msra.mxu0 0
    %1450 = vmatpush.bf16.msra.mxu0 0
    %1451 = vmatpush.bf16.msra.mxu0 0
    %1452 = vmatpush.bf16.msra.mxu0 0
    %1453 = vmatpush.bf16.msra.mxu0 0
    %1454 = vmatpush.bf16.msra.mxu0 %v813
    %1455 = vmatpush.bf16.msra.mxu0 %v751
    %1456 = vmatmul.bf16.gmra.mxu0 %v1389
    %v1457 = vpop.f32.mrf.mxu0
    %v1458 = vadd.f32 %v1440, %v1457
    %v1459 = vpop.f32.mrf.mxu0
    %v1460 = vadd.f32 %v1442, %v1459
    %1461 = vmatmul.bf16.gmra.mxu0 %v1392
    %v1462 = vpop.f32.mrf.mxu0
    %v1463 = vadd.f32 %v1445, %v1462
    %v1464 = vpop.f32.mrf.mxu0
    %1465 = vdwg.mxu0
    %1466 = vmatpush.bf16.msra.mxu0 %v718
    %1467 = vmatpush.bf16.msra.mxu0 %v716
    %1468 = vmatpush.bf16.msra.mxu0 %v714
    %1469 = vmatpush.bf16.msra.mxu0 %v712
    %1470 = vmatpush.bf16.msra.mxu0 %v710
    %1471 = vmatpush.bf16.msra.mxu0 %v708
    %1472 = vmatpush.bf16.msra.mxu0 %v706
    %1473 = vmatpush.bf16.msra.mxu0 %v704
    %1474 = vmatmul.bf16.gmra.mxu0 %v1380
    %v1475 = vpop.f32.mrf.mxu0
    %v1476 = vadd.f32 %v544, %v1475
    %v1477 = vpop.f32.mrf.mxu0
    %v1478 = vadd.f32 %v544, %v1477
    %1479 = vmatmul.bf16.gmra.mxu0 %v1384
    %v1480 = vpop.f32.mrf.mxu0
    %v1481 = vadd.f32 %v544, %v1480
    %v1482 = vpop.f32.mrf.mxu0
    %1483 = vdwg.mxu0
    %1484 = vmatpush.bf16.msra.mxu0 %v734
    %1485 = vmatpush.bf16.msra.mxu0 %v732
    %1486 = vmatpush.bf16.msra.mxu0 %v730
    %1487 = vmatpush.bf16.msra.mxu0 %v728
    %1488 = vmatpush.bf16.msra.mxu0 %v726
    %1489 = vmatpush.bf16.msra.mxu0 %v724
    %1490 = vmatpush.bf16.msra.mxu0 %v722
    %1491 = vmatpush.bf16.msra.mxu0 %v720
    %1492 = vmatmul.bf16.gmra.mxu0 %v1381
    %v1493 = vpop.f32.mrf.mxu0
    %v1494 = vadd.f32 %v1476, %v1493
    %v1495 = vpop.f32.mrf.mxu0
    %v1496 = vadd.f32 %v1478, %v1495
    %1497 = vmatmul.bf16.gmra.mxu0 %v1385
    %v1498 = vpop.f32.mrf.mxu0
    %v1499 = vadd.f32 %v1481, %v1498
    %v1500 = vpop.f32.mrf.mxu0
    %1501 = vdwg.mxu0
    %1502 = vmatpush.bf16.msra.mxu0 %v750
    %1503 = vmatpush.bf16.msra.mxu0 %v748
    %1504 = vmatpush.bf16.msra.mxu0 %v746
    %1505 = vmatpush.bf16.msra.mxu0 %v744
    %1506 = vmatpush.bf16.msra.mxu0 %v742
    %1507 = vmatpush.bf16.msra.mxu0 %v740
    %1508 = vmatpush.bf16.msra.mxu0 %v738
    %1509 = vmatpush.bf16.msra.mxu0 %v736
    %1510 = vmatmul.bf16.gmra.mxu0 %v1382
    %v1511 = vpop.f32.mrf.mxu0
    %v1512 = vadd.f32 %v1494, %v1511
    %v1513 = vpop.f32.mrf.mxu0
    %v1514 = vadd.f32 %v1496, %v1513
    %1515 = vmatmul.bf16.gmra.mxu0 %v1386
    %v1516 = vpop.f32.mrf.mxu0
    %v1517 = vadd.f32 %v1499, %v1516
    %v1518 = vpop.f32.mrf.mxu0
    %1519 = vdwg.mxu0
    %1520 = vmatpush.bf16.msra.mxu0 0
    %1521 = vmatpush.bf16.msra.mxu0 0
    %1522 = vmatpush.bf16.msra.mxu0 0
    %1523 = vmatpush.bf16.msra.mxu0 0
    %1524 = vmatpush.bf16.msra.mxu0 0
    %1525 = vmatpush.bf16.msra.mxu0 0
    %1526 = vmatpush.bf16.msra.mxu0 %v816
    %1527 = vmatpush.bf16.msra.mxu0 %v752
    %1528 = vmatmul.bf16.gmra.mxu0 %v1389
    %v1529 = vpop.f32.mrf.mxu0
    %v1530 = vadd.f32 %v1512, %v1529
    %v1531 = vpop.f32.mrf.mxu0
    %v1532 = vadd.f32 %v1514, %v1531
    %1533 = vmatmul.bf16.gmra.mxu0 %v1392
    %v1534 = vpop.f32.mrf.mxu0
    %v1535 = vadd.f32 %v1517, %v1534
    %v1536 = vpop.f32.mrf.mxu0
    %1537 = vdwg.mxu0
    %v1538 = vmax.f32 %v1458, 0.0
    %v1539 = vmax.f32 %v1530, 0.0
    %v1540 = vmax.f32 %v1460, 0.0
    %v1541 = vmax.f32 %v1532, 0.0
    %v1542 = vmax.f32 %v1463, 0.0
    %v1543 = vmax.f32 %v1535, 0.0
    %v1550 = vrot.slane %v1538, 2
    %v1551 = vrot.slane %v1540, 2
    %v1552 = vsel %vm141, %v1550, %v1551
    %v1553 = vrot.slane %v1539, 2
    %v1554 = vrot.slane %v1541, 2
    %v1555 = vsel %vm141, %v1553, %v1554
    %v1556 = vrot.slane %v1542, 2
    %v1557 = vsel %vm141, %v1551, %v1556
    %v1558 = vrot.slane %v1543, 2
    %v1559 = vsel %vm141, %v1554, %v1558
    %v1566 = vmax.f32 %v1538, %v1552
    %v1567 = vmax.f32 %v1539, %v1555
    %v1568 = vmax.f32 %v1540, %v1557
    %v1569 = vmax.f32 %v1541, %v1559
    %v1570 = vmax.f32 %v1542, %v1556
    %v1571 = vmax.f32 %v1543, %v1558
    %1578 = vrot.lane.b32.xlu0 %v1566, 108
    %v1579 = vpop.permute.xlu0 %1578
    %1580 = vrot.lane.b32.xlu0 %v1567, 108
    %v1581 = vpop.permute.xlu0 %1580
    %1582 = vrot.lane.b32.xlu0 %v1568, 108
    %v1583 = vpop.permute.xlu0 %1582
    %1584 = vrot.lane.b32.xlu0 %v1569, 108
    %v1585 = vpop.permute.xlu0 %1584
    %1586 = vrot.lane.b32.xlu0 %v1570, 108
    %v1587 = vpop.permute.xlu0 %1586
    %1588 = vrot.lane.b32.xlu0 %v1571, 108
    %v1589 = vpop.permute.xlu0 %1588
    %v1590 = vsel %vm1014, %v1579, %v1581
    %v1591 = vsel %vm1014, %v1583, %v1585
    %v1592 = vsel %vm1014, %v1587, %v1589
    %v1599 = vmax.f32 %v1566, %v1590
    %v1600 = vmax.f32 %v1567, %v1581
    %v1601 = vmax.f32 %v1568, %v1591
    %v1602 = vmax.f32 %v1569, %v1585
    %v1603 = vmax.f32 %v1570, %v1592
    %v1604 = vmax.f32 %v1571, %v1589
    %v1607 = vrot.slane %v1599, 4
    %v1608 = vrot.slane %v1600, 4
    %1609 = vrot.lane.b32.xlu0 %v1607, 52
    %v1610 = vpop.permute.xlu0 %1609
    %1611 = vrot.lane.b32.xlu0 %v1608, 52
    %v1612 = vpop.permute.xlu0 %1611
    %v1613 = vsel %vm1038, %v1610, %v1612
    %1618 = vrot.lane.b32.xlu0 %v1601, 104
    %v1619 = vpop.permute.xlu0 %1618
    %1620 = vrot.lane.b32.xlu0 %v1602, 104
    %v1621 = vpop.permute.xlu0 %1620
    %v1622 = vsel %vm1048, %v1619, %v1621
    %v1625 = vrot.slane %v1601, 4
    %v1626 = vrot.slane %v1602, 4
    %1627 = vrot.lane.b32.xlu0 %v1625, 28
    %v1628 = vpop.permute.xlu0 %1627
    %1629 = vrot.lane.b32.xlu0 %v1626, 28
    %v1630 = vpop.permute.xlu0 %1629
    %v1631 = vsel %vm192, %v1628, %v1630
    %1636 = vrot.lane.b32.xlu0 %v1603, 80
    %v1637 = vpop.permute.xlu0 %1636
    %1638 = vrot.lane.b32.xlu0 %v1604, 80
    %v1639 = vpop.permute.xlu0 %1638
    %v1640 = vsel %vm1068, %v1637, %v1639
    %v1642 = vsel %vm1038, %v1600, %v1610
    %v1643 = vsel %vm1048, %v1613, %v1619
    %v1644 = vsel %vm192, %v1621, %v1628
    %v1645 = vsel %vm1068, %v1631, %v1637
    %v1650 = vrot.slane %v1599, 7
    %v1651 = vrot.slane %v1642, 7
    %v1652 = vrot.slane %v1643, 7
    %v1653 = vrot.slane %v1622, 7
    %v1654 = vrot.slane %v1644, 7
    %v1655 = vrot.slane %v1645, 7
    %v1656 = vrot.slane %v1640, 7
    %v1657 = vrot.slane %v1639, 7
    %vm1666 = vcmask 1040384
    %v1667 = vsel %vm1666, %v1024, %v1650
    %v1668 = vsel %vm1666, %v1073, %v1651
    %v1669 = vsel %vm1666, %v1074, %v1652
    %v1670 = vsel %vm1666, %v1049, %v1653
    %v1671 = vsel %vm1666, %v1075, %v1654
    %v1672 = vsel %vm1666, %v1076, %v1655
    %v1673 = vsel %vm1666, %v1069, %v1656
    %v1674 = vsel %vm1666, %v1067, %v1657
    %v1675 = vld [vmem:[%s5] sm:$0xf]
    %v1676 = vld [vmem:[%s5 + $0x4] sm:$0xf]
    %v1677 = vld [vmem:[%s5 + $0x8] sm:$0xf]
    %v1678 = vld [vmem:[%s5 + $0xc] sm:$0xf]
    %v1679 = vld [vmem:[%s5 + $0x10] sm:$0xf]
    %v1680 = vld [vmem:[%s5 + $0x14] sm:$0xf]
    %v1681 = vld [vmem:[%s5 + $0x18] sm:$0xf]
    %v1682 = vld [vmem:[%s5 + $0x1c] sm:$0xf]
    %v1683 = vld [vmem:[%s5 + $0x20] sm:$0xf]
    %v1684 = vld [vmem:[%s5 + $0x24] sm:$0xf]
    %v1685 = vld [vmem:[%s5 + $0x28] sm:$0xf]
    %v1686 = vld [vmem:[%s5 + $0x2c] sm:$0xf]
    %v1687 = vld [vmem:[%s5 + $0x30] sm:$0xf]
    %v1688 = vld [vmem:[%s5 + $0x34] sm:$0xf]
    %v1689 = vld [vmem:[%s5 + $0x38] sm:$0xf]
    %v1690 = vld [vmem:[%s5 + $0x3c] sm:$0xf]
    %v1691 = vld [vmem:[%s5 + $0x40] sm:$0xf]
    %v1692 = vld [vmem:[%s5 + $0x44] sm:$0xf]
    %v1693 = vld [vmem:[%s5 + $0x48] sm:$0xf]
    %v1694 = vld [vmem:[%s5 + $0x4c] sm:$0xf]
    %v1695 = vld [vmem:[%s5 + $0x50] sm:$0xf]
    %v1696 = vld [vmem:[%s5 + $0x54] sm:$0xf]
    %v1697 = vld [vmem:[%s5 + $0x58] sm:$0xf]
    %v1698 = vld [vmem:[%s5 + $0x5c] sm:$0xf]
    %v1699 = vld [vmem:[%s5 + $0x60] sm:$0xf]
    %v1700 = vld [vmem:[%s5 + $0x64] sm:$0xf]
    %v1701 = vld [vmem:[%s5 + $0x68] sm:$0xf]
    %v1702 = vld [vmem:[%s5 + $0x6c] sm:$0xf]
    %v1703 = vld [vmem:[%s5 + $0x70] sm:$0xf]
    %v1704 = vld [vmem:[%s5 + $0x74] sm:$0xf]
    %v1705 = vld [vmem:[%s5 + $0x78] sm:$0xf]
    %v1706 = vld [vmem:[%s5 + $0x7c] sm:$0xf]
    %v1707 = vld [vmem:[%s5 + $0x80] sm:$0xf]
    %v1708 = vld [vmem:[%s5 + $0x84] sm:$0xf]
    %v1709 = vld [vmem:[%s5 + $0x88] sm:$0xf]
    %v1710 = vld [vmem:[%s5 + $0x8c] sm:$0xf]
    %v1711 = vld [vmem:[%s5 + $0x90] sm:$0xf]
    %v1712 = vld [vmem:[%s5 + $0x94] sm:$0xf]
    %v1713 = vld [vmem:[%s5 + $0x98] sm:$0xf]
    %v1714 = vld [vmem:[%s5 + $0x9c] sm:$0xf]
    %v1715 = vld [vmem:[%s5 + $0xa0] sm:$0xf]
    %v1716 = vld [vmem:[%s5 + $0xa4] sm:$0xf]
    %v1717 = vld [vmem:[%s5 + $0xa8] sm:$0xf]
    %v1718 = vld [vmem:[%s5 + $0xac] sm:$0xf]
    %v1719 = vld [vmem:[%s5 + $0xb0] sm:$0xf]
    %v1720 = vld [vmem:[%s5 + $0xb4] sm:$0xf]
    %v1721 = vld [vmem:[%s5 + $0xb8] sm:$0xf]
    %v1722 = vld [vmem:[%s5 + $0xbc] sm:$0xf]
    %v1723 = vld [vmem:[%s5 + $0xc0] sm:$0xf]
    %v1724 = vld [vmem:[%s5 + $0xc4] sm:$0xf]
    %v1725 = vld [vmem:[%s5 + $0xc8] sm:$0xf]
    %v1726 = vld [vmem:[%s5 + $0xcc] sm:$0xf]
    %v1727 = vld [vmem:[%s5 + $0xd0] sm:$0xf]
    %v1728 = vld [vmem:[%s5 + $0xd4] sm:$0xf]
    %v1729 = vld [vmem:[%s5 + $0xd8] sm:$0xf]
    %v1730 = vld [vmem:[%s5 + $0xdc] sm:$0xf]
    %v1731 = vld [vmem:[%s5 + $0xe0] sm:$0xf]
    %v1732 = vld [vmem:[%s5 + $0xe4] sm:$0xf]
    %v1733 = vld [vmem:[%s5 + $0xe8] sm:$0xf]
    %v1734 = vld [vmem:[%s5 + $0xec] sm:$0xf]
    %v1735 = vld [vmem:[%s5 + $0xf0] sm:$0xf]
    %v1736 = vld [vmem:[%s5 + $0xf4] sm:$0xf]
    %v1737 = vld [vmem:[%s5 + $0xf8] sm:$0xf]
    %v1738 = vld [vmem:[%s5 + $0xfc] sm:$0xf]
    %v1739 = vld [vmem:[%s5 + $0x100] sm:$0xf]
    %v1740 = vld [vmem:[%s5 + $0x104] sm:$0xf]
    %v1741 = vld [vmem:[%s5 + $0x108] sm:$0xf]
    %v1742 = vld [vmem:[%s5 + $0x10c] sm:$0xf]
    %v1743 = vld [vmem:[%s5 + $0x110] sm:$0xf]
    %v1744 = vld [vmem:[%s5 + $0x114] sm:$0xf]
    %v1745 = vld [vmem:[%s5 + $0x118] sm:$0xf]
    %v1746 = vld [vmem:[%s5 + $0x11c] sm:$0xf]
    %v1747 = vld [vmem:[%s5 + $0x120] sm:$0xf]
    %v1748 = vld [vmem:[%s5 + $0x124] sm:$0xf]
    %v1749 = vld [vmem:[%s5 + $0x128] sm:$0xf]
    %v1750 = vld [vmem:[%s5 + $0x12c] sm:$0xf]
    %v1751 = vld [vmem:[%s5 + $0x130] sm:$0xf]
    %v1752 = vld [vmem:[%s5 + $0x134] sm:$0xf]
    %v1753 = vld [vmem:[%s5 + $0x138] sm:$0xf]
    %v1754 = vld [vmem:[%s5 + $0x13c] sm:$0xf]
    %v1755 = vld [vmem:[%s5 + $0x140] sm:$0xf]
    %v1756 = vld [vmem:[%s5 + $0x144] sm:$0xf]
    %v1757 = vld [vmem:[%s5 + $0x148] sm:$0xf]
    %v1758 = vld [vmem:[%s5 + $0x14c] sm:$0xf]
    %v1759 = vld [vmem:[%s5 + $0x150] sm:$0xf]
    %v1760 = vld [vmem:[%s5 + $0x154] sm:$0xf]
    %v1761 = vld [vmem:[%s5 + $0x158] sm:$0xf]
    %v1762 = vld [vmem:[%s5 + $0x15c] sm:$0xf]
    %v1763 = vld [vmem:[%s5 + $0x160] sm:$0xf]
    %v1764 = vld [vmem:[%s5 + $0x164] sm:$0xf]
    %v1765 = vld [vmem:[%s5 + $0x168] sm:$0xf]
    %v1766 = vld [vmem:[%s5 + $0x16c] sm:$0xf]
    %v1767 = vld [vmem:[%s5 + $0x170] sm:$0xf]
    %v1768 = vld [vmem:[%s5 + $0x174] sm:$0xf]
    %v1769 = vld [vmem:[%s5 + $0x178] sm:$0xf]
    %v1770 = vld [vmem:[%s5 + $0x17c] sm:$0xf]
    %v1771 = vld [vmem:[%s5 + $0x180] sm:$0xf]
    %v1772 = vld [vmem:[%s5 + $0x184] sm:$0xf]
    %v1773 = vld [vmem:[%s5 + $0x188] sm:$0xf]
    %v1774 = vld [vmem:[%s5 + $0x18c] sm:$0xf]
    %v1775 = vld [vmem:[%s5 + $0x190] sm:$0xf]
    %v1776 = vld [vmem:[%s5 + $0x194] sm:$0xf]
    %v1777 = vld [vmem:[%s5 + $0x198] sm:$0xf]
    %v1778 = vld [vmem:[%s5 + $0x19c] sm:$0xf]
    %v1779 = vld [vmem:[%s5 + $0x1a0] sm:$0xf]
    %v1780 = vld [vmem:[%s5 + $0x1a4] sm:$0xf]
    %v1781 = vld [vmem:[%s5 + $0x1a8] sm:$0xf]
    %v1782 = vld [vmem:[%s5 + $0x1ac] sm:$0xf]
    %v1783 = vld [vmem:[%s5 + $0x1b0] sm:$0xf]
    %v1784 = vld [vmem:[%s5 + $0x1b4] sm:$0xf]
    %v1785 = vld [vmem:[%s5 + $0x1b8] sm:$0xf]
    %v1786 = vld [vmem:[%s5 + $0x1bc] sm:$0xf]
    %v1787 = vld [vmem:[%s5 + $0x1c0] sm:$0x3]
    %v1788 = vpack.c.bf16 %v1667, %v1667
    %v1789 = vpack.c.bf16 %v1668, %v1668
    %v1790 = vpack.c.bf16 %v1669, %v1669
    %v1791 = vpack.c.bf16 %v1670, %v1670
    %v1792 = vpack.c.bf16 %v1671, %v1671
    %v1793 = vpack.c.bf16 %v1672, %v1672
    %v1794 = vpack.c.bf16 %v1673, %v1673
    %v1795 = vpack.c.bf16 %v1674, %v1674
    %v1796 = vld [vmem:[%s6] sm:$0x1]
    %v1798 = vperm.slane %v1796, 0
    %v1913 = vunpack.c.l.b16 %v1675
    %v1914 = vunpack.c.l.b16 %v1676
    %v1915 = vunpack.c.l.b16 %v1677
    %v1916 = vunpack.c.l.b16 %v1678
    %v1917 = vunpack.c.l.b16 %v1679
    %v1918 = vunpack.c.l.b16 %v1680
    %v1919 = vunpack.c.l.b16 %v1681
    %v1920 = vunpack.c.l.b16 %v1682
    %v1921 = vunpack.c.l.b16 %v1683
    %v1922 = vunpack.c.l.b16 %v1684
    %v1923 = vunpack.c.l.b16 %v1685
    %v1924 = vunpack.c.l.b16 %v1686
    %v1925 = vunpack.c.l.b16 %v1687
    %v1926 = vunpack.c.l.b16 %v1688
    %v1927 = vunpack.c.l.b16 %v1689
    %v1928 = vunpack.c.l.b16 %v1690
    %v1929 = vunpack.c.l.b16 %v1691
    %v1930 = vunpack.c.l.b16 %v1692
    %v1931 = vunpack.c.l.b16 %v1693
    %v1932 = vunpack.c.l.b16 %v1694
    %v1933 = vunpack.c.l.b16 %v1695
    %v1934 = vunpack.c.l.b16 %v1696
    %v1935 = vunpack.c.l.b16 %v1697
    %v1936 = vunpack.c.l.b16 %v1698
    %v1937 = vunpack.c.l.b16 %v1699
    %v1938 = vunpack.c.l.b16 %v1700
    %v1939 = vunpack.c.l.b16 %v1701
    %v1940 = vunpack.c.l.b16 %v1702
    %v1941 = vunpack.c.l.b16 %v1703
    %v1942 = vunpack.c.l.b16 %v1704
    %v1943 = vunpack.c.l.b16 %v1705
    %v1944 = vunpack.c.l.b16 %v1706
    %v1945 = vunpack.c.l.b16 %v1707
    %v1946 = vunpack.c.l.b16 %v1708
    %v1947 = vunpack.c.l.b16 %v1709
    %v1948 = vunpack.c.l.b16 %v1710
    %v1949 = vunpack.c.l.b16 %v1711
    %v1950 = vunpack.c.l.b16 %v1712
    %v1951 = vunpack.c.l.b16 %v1713
    %v1952 = vunpack.c.l.b16 %v1714
    %v1953 = vunpack.c.l.b16 %v1715
    %v1954 = vunpack.c.l.b16 %v1716
    %v1955 = vunpack.c.l.b16 %v1717
    %v1956 = vunpack.c.l.b16 %v1718
    %v1957 = vunpack.c.l.b16 %v1719
    %v1958 = vunpack.c.l.b16 %v1720
    %v1959 = vunpack.c.l.b16 %v1721
    %v1960 = vunpack.c.l.b16 %v1722
    %v1961 = vunpack.c.l.b16 %v1723
    %v1962 = vunpack.c.l.b16 %v1724
    %v1963 = vunpack.c.l.b16 %v1725
    %v1964 = vunpack.c.l.b16 %v1726
    %v1965 = vunpack.c.l.b16 %v1727
    %v1966 = vunpack.c.l.b16 %v1728
    %v1967 = vunpack.c.l.b16 %v1729
    %v1968 = vunpack.c.l.b16 %v1730
    %v1969 = vunpack.c.l.b16 %v1731
    %v1970 = vunpack.c.l.b16 %v1732
    %v1971 = vunpack.c.l.b16 %v1733
    %v1972 = vunpack.c.l.b16 %v1734
    %v1973 = vunpack.c.l.b16 %v1735
    %v1974 = vunpack.c.l.b16 %v1736
    %v1975 = vunpack.c.l.b16 %v1737
    %v1976 = vunpack.c.l.b16 %v1738
    %v1977 = vunpack.c.l.b16 %v1739
    %v1978 = vunpack.c.l.b16 %v1740
    %v1979 = vunpack.c.l.b16 %v1741
    %v1980 = vunpack.c.l.b16 %v1742
    %v1981 = vunpack.c.l.b16 %v1743
    %v1982 = vunpack.c.l.b16 %v1744
    %v1983 = vunpack.c.l.b16 %v1745
    %v1984 = vunpack.c.l.b16 %v1746
    %v1985 = vunpack.c.l.b16 %v1747
    %v1986 = vunpack.c.l.b16 %v1748
    %v1987 = vunpack.c.l.b16 %v1749
    %v1988 = vunpack.c.l.b16 %v1750
    %v1989 = vunpack.c.l.b16 %v1751
    %v1990 = vunpack.c.l.b16 %v1752
    %v1991 = vunpack.c.l.b16 %v1753
    %v1992 = vunpack.c.l.b16 %v1754
    %v1993 = vunpack.c.l.b16 %v1755
    %v1994 = vunpack.c.l.b16 %v1756
    %v1995 = vunpack.c.l.b16 %v1757
    %v1996 = vunpack.c.l.b16 %v1758
    %v1997 = vunpack.c.l.b16 %v1759
    %v1998 = vunpack.c.l.b16 %v1760
    %v1999 = vunpack.c.l.b16 %v1761
    %v2000 = vunpack.c.l.b16 %v1762
    %v2001 = vunpack.c.l.b16 %v1763
    %v2002 = vunpack.c.l.b16 %v1764
    %v2003 = vunpack.c.l.b16 %v1765
    %v2004 = vunpack.c.l.b16 %v1766
    %v2005 = vunpack.c.l.b16 %v1767
    %v2006 = vunpack.c.l.b16 %v1768
    %v2007 = vunpack.c.l.b16 %v1769
    %v2008 = vunpack.c.l.b16 %v1770
    %v2009 = vunpack.c.l.b16 %v1771
    %v2010 = vunpack.c.l.b16 %v1772
    %v2011 = vunpack.c.l.b16 %v1773
    %v2012 = vunpack.c.l.b16 %v1774
    %v2013 = vunpack.c.l.b16 %v1775
    %v2014 = vunpack.c.l.b16 %v1776
    %v2015 = vunpack.c.l.b16 %v1777
    %v2016 = vunpack.c.l.b16 %v1778
    %v2017 = vunpack.c.l.b16 %v1779
    %v2018 = vunpack.c.l.b16 %v1780
    %v2019 = vunpack.c.l.b16 %v1781
    %v2020 = vunpack.c.l.b16 %v1782
    %v2021 = vunpack.c.l.b16 %v1783
    %v2022 = vunpack.c.l.b16 %v1784
    %v2023 = vunpack.c.l.b16 %v1785
    %v2024 = vunpack.c.l.b16 %v1786
    %v2025 = vunpack.c.l.b16 %v1787
    %v2026 = vpack.c.b16 %v1914, %v1913
    %v2027 = vpack.c.b16 %v1916, %v1915
    %v2028 = vpack.c.b16 %v1918, %v1917
    %v2029 = vpack.c.b16 %v1920, %v1919
    %v2030 = vpack.c.b16 %v1922, %v1921
    %v2031 = vpack.c.b16 %v1924, %v1923
    %v2032 = vpack.c.b16 %v1926, %v1925
    %v2033 = vpack.c.b16 %v1928, %v1927
    %v2034 = vpack.c.b16 %v1930, %v1929
    %v2035 = vpack.c.b16 %v1932, %v1931
    %v2036 = vpack.c.b16 %v1934, %v1933
    %v2037 = vpack.c.b16 %v1936, %v1935
    %v2038 = vpack.c.b16 %v1938, %v1937
    %v2039 = vpack.c.b16 %v1940, %v1939
    %v2040 = vpack.c.b16 %v1942, %v1941
    %v2041 = vpack.c.b16 %v1944, %v1943
    %v2042 = vpack.c.b16 %v1946, %v1945
    %v2043 = vpack.c.b16 %v1948, %v1947
    %v2044 = vpack.c.b16 %v1950, %v1949
    %v2045 = vpack.c.b16 %v1952, %v1951
    %v2046 = vpack.c.b16 %v1954, %v1953
    %v2047 = vpack.c.b16 %v1956, %v1955
    %v2048 = vpack.c.b16 %v1958, %v1957
    %v2049 = vpack.c.b16 %v1960, %v1959
    %v2050 = vpack.c.b16 %v1962, %v1961
    %v2051 = vpack.c.b16 %v1964, %v1963
    %v2052 = vpack.c.b16 %v1966, %v1965
    %v2053 = vpack.c.b16 %v1968, %v1967
    %v2054 = vpack.c.b16 %v1970, %v1969
    %v2055 = vpack.c.b16 %v1972, %v1971
    %v2056 = vpack.c.b16 %v1974, %v1973
    %v2057 = vpack.c.b16 %v1976, %v1975
    %v2058 = vpack.c.b16 %v1978, %v1977
    %v2059 = vpack.c.b16 %v1980, %v1979
    %v2060 = vpack.c.b16 %v1982, %v1981
    %v2061 = vpack.c.b16 %v1984, %v1983
    %v2062 = vpack.c.b16 %v1986, %v1985
    %v2063 = vpack.c.b16 %v1988, %v1987
    %v2064 = vpack.c.b16 %v1990, %v1989
    %v2065 = vpack.c.b16 %v1992, %v1991
    %v2066 = vpack.c.b16 %v1994, %v1993
    %v2067 = vpack.c.b16 %v1996, %v1995
    %v2068 = vpack.c.b16 %v1998, %v1997
    %v2069 = vpack.c.b16 %v2000, %v1999
    %v2070 = vpack.c.b16 %v2002, %v2001
    %v2071 = vpack.c.b16 %v2004, %v2003
    %v2072 = vpack.c.b16 %v2006, %v2005
    %v2073 = vpack.c.b16 %v2008, %v2007
    %v2074 = vpack.c.b16 %v2010, %v2009
    %v2075 = vpack.c.b16 %v2012, %v2011
    %v2076 = vpack.c.b16 %v2014, %v2013
    %v2077 = vpack.c.b16 %v2016, %v2015
    %v2078 = vpack.c.b16 %v2018, %v2017
    %v2079 = vpack.c.b16 %v2020, %v2019
    %v2080 = vpack.c.b16 %v2022, %v2021
    %v2081 = vpack.c.b16 %v2024, %v2023
    %v2082 = vpack.c.b16 %v2025, %v2025
    %vm2139 = vcmask 31744
    %v2141 = vsel %vm2139, %v1795, 0
    %vm2143 = vcmask 1041408
    %v2145 = vsel %vm2143, %v2082, 0
    %2147 = vmatpush.bf16.msra.mxu0 %v2033
    %2148 = vmatpush.bf16.msra.mxu0 %v2032
    %2149 = vmatpush.bf16.msra.mxu0 %v2031
    %2150 = vmatpush.bf16.msra.mxu0 %v2030
    %2151 = vmatpush.bf16.msra.mxu0 %v2029
    %2152 = vmatpush.bf16.msra.mxu0 %v2028
    %2153 = vmatpush.bf16.msra.mxu0 %v2027
    %2154 = vmatpush.bf16.msra.mxu0 %v2026
    %2155 = vmatmul.bf16.gmra.mxu0 %v1788
    %v2156 = vpop.f32.mrf.mxu0
    %v2157 = vadd.f32 %v1798, %v2156
    %v2158 = vpop.f32.mrf.mxu0
    %2159 = vdwg.mxu0
    %2160 = vmatpush.bf16.msra.mxu0 %v2041
    %2161 = vmatpush.bf16.msra.mxu0 %v2040
    %2162 = vmatpush.bf16.msra.mxu0 %v2039
    %2163 = vmatpush.bf16.msra.mxu0 %v2038
    %2164 = vmatpush.bf16.msra.mxu0 %v2037
    %2165 = vmatpush.bf16.msra.mxu0 %v2036
    %2166 = vmatpush.bf16.msra.mxu0 %v2035
    %2167 = vmatpush.bf16.msra.mxu0 %v2034
    %2168 = vmatmul.bf16.gmra.mxu0 %v1789
    %v2169 = vpop.f32.mrf.mxu0
    %v2170 = vadd.f32 %v2157, %v2169
    %v2171 = vpop.f32.mrf.mxu0
    %2172 = vdwg.mxu0
    %2173 = vmatpush.bf16.msra.mxu0 %v2049
    %2174 = vmatpush.bf16.msra.mxu0 %v2048
    %2175 = vmatpush.bf16.msra.mxu0 %v2047
    %2176 = vmatpush.bf16.msra.mxu0 %v2046
    %2177 = vmatpush.bf16.msra.mxu0 %v2045
    %2178 = vmatpush.bf16.msra.mxu0 %v2044
    %2179 = vmatpush.bf16.msra.mxu0 %v2043
    %2180 = vmatpush.bf16.msra.mxu0 %v2042
    %2181 = vmatmul.bf16.gmra.mxu0 %v1790
    %v2182 = vpop.f32.mrf.mxu0
    %v2183 = vadd.f32 %v2170, %v2182
    %v2184 = vpop.f32.mrf.mxu0
    %2185 = vdwg.mxu0
    %2186 = vmatpush.bf16.msra.mxu0 %v2057
    %2187 = vmatpush.bf16.msra.mxu0 %v2056
    %2188 = vmatpush.bf16.msra.mxu0 %v2055
    %2189 = vmatpush.bf16.msra.mxu0 %v2054
    %2190 = vmatpush.bf16.msra.mxu0 %v2053
    %2191 = vmatpush.bf16.msra.mxu0 %v2052
    %2192 = vmatpush.bf16.msra.mxu0 %v2051
    %2193 = vmatpush.bf16.msra.mxu0 %v2050
    %2194 = vmatmul.bf16.gmra.mxu0 %v1791
    %v2195 = vpop.f32.mrf.mxu0
    %v2196 = vadd.f32 %v2183, %v2195
    %v2197 = vpop.f32.mrf.mxu0
    %2198 = vdwg.mxu0
    %2199 = vmatpush.bf16.msra.mxu0 %v2065
    %2200 = vmatpush.bf16.msra.mxu0 %v2064
    %2201 = vmatpush.bf16.msra.mxu0 %v2063
    %2202 = vmatpush.bf16.msra.mxu0 %v2062
    %2203 = vmatpush.bf16.msra.mxu0 %v2061
    %2204 = vmatpush.bf16.msra.mxu0 %v2060
    %2205 = vmatpush.bf16.msra.mxu0 %v2059
    %2206 = vmatpush.bf16.msra.mxu0 %v2058
    %2207 = vmatmul.bf16.gmra.mxu0 %v1792
    %v2208 = vpop.f32.mrf.mxu0
    %v2209 = vadd.f32 %v2196, %v2208
    %v2210 = vpop.f32.mrf.mxu0
    %2211 = vdwg.mxu0
    %2212 = vmatpush.bf16.msra.mxu0 %v2073
    %2213 = vmatpush.bf16.msra.mxu0 %v2072
    %2214 = vmatpush.bf16.msra.mxu0 %v2071
    %2215 = vmatpush.bf16.msra.mxu0 %v2070
    %2216 = vmatpush.bf16.msra.mxu0 %v2069
    %2217 = vmatpush.bf16.msra.mxu0 %v2068
    %2218 = vmatpush.bf16.msra.mxu0 %v2067
    %2219 = vmatpush.bf16.msra.mxu0 %v2066
    %2220 = vmatmul.bf16.gmra.mxu0 %v1793
    %v2221 = vpop.f32.mrf.mxu0
    %v2222 = vadd.f32 %v2209, %v2221
    %v2223 = vpop.f32.mrf.mxu0
    %2224 = vdwg.mxu0
    %2225 = vmatpush.bf16.msra.mxu0 %v2081
    %2226 = vmatpush.bf16.msra.mxu0 %v2080
    %2227 = vmatpush.bf16.msra.mxu0 %v2079
    %2228 = vmatpush.bf16.msra.mxu0 %v2078
    %2229 = vmatpush.bf16.msra.mxu0 %v2077
    %2230 = vmatpush.bf16.msra.mxu0 %v2076
    %2231 = vmatpush.bf16.msra.mxu0 %v2075
    %2232 = vmatpush.bf16.msra.mxu0 %v2074
    %2233 = vmatmul.bf16.gmra.mxu0 %v1794
    %v2234 = vpop.f32.mrf.mxu0
    %v2235 = vadd.f32 %v2222, %v2234
    %v2236 = vpop.f32.mrf.mxu0
    %2237 = vdwg.mxu0
    %2238 = vmatpush.bf16.msra.mxu0 0
    %2239 = vmatpush.bf16.msra.mxu0 0
    %2240 = vmatpush.bf16.msra.mxu0 0
    %2241 = vmatpush.bf16.msra.mxu0 0
    %2242 = vmatpush.bf16.msra.mxu0 0
    %2243 = vmatpush.bf16.msra.mxu0 0
    %2244 = vmatpush.bf16.msra.mxu0 0
    %2245 = vmatpush.bf16.msra.mxu0 %v2145
    %2246 = vmatmul.bf16.gmra.mxu0 %v2141
    %v2247 = vpop.f32.mrf.mxu0
    %v2248 = vadd.f32 %v2235, %v2247
    %v2249 = vpop.f32.mrf.mxu0
    %2250 = vdwg.mxu0
    %v2251 = vmax.f32 %v2248, 0.0
    %v2252 = vld [vmem:[%s7] sm:$0xf]
    %v2253 = vld [vmem:[%s7 + $0x4] sm:$0xf]
    %v2254 = vld [vmem:[%s7 + $0x8] sm:$0xf]
    %v2255 = vld [vmem:[%s7 + $0xc] sm:$0xf]
    %v2256 = vld [vmem:[%s7 + $0x10] sm:$0xf]
    %v2257 = vld [vmem:[%s7 + $0x14] sm:$0xf]
    %v2258 = vld [vmem:[%s7 + $0x18] sm:$0xf]
    %v2259 = vld [vmem:[%s7 + $0x1c] sm:$0xf]
    %v2260 = vld [vmem:[%s7 + $0x20] sm:$0xf]
    %v2261 = vld [vmem:[%s7 + $0x24] sm:$0xf]
    %v2262 = vld [vmem:[%s7 + $0x28] sm:$0xf]
    %v2263 = vld [vmem:[%s7 + $0x2c] sm:$0xf]
    %v2264 = vld [vmem:[%s7 + $0x30] sm:$0xf]
    %v2265 = vld [vmem:[%s7 + $0x34] sm:$0xf]
    %v2266 = vld [vmem:[%s7 + $0x38] sm:$0xf]
    %v2267 = vpack.c.bf16 %v2251, %v2251
    %v2268 = vld [vmem:[%s8] sm:$0x1]
    %v2270 = vperm.slane %v2268, 0
    %v2287 = vunpack.c.l.b16 %v2252
    %v2288 = vunpack.c.l.b16 %v2253
    %v2289 = vunpack.c.l.b16 %v2254
    %v2290 = vunpack.c.l.b16 %v2255
    %v2291 = vunpack.c.l.b16 %v2256
    %v2292 = vunpack.c.l.b16 %v2257
    %v2293 = vunpack.c.l.b16 %v2258
    %v2294 = vunpack.c.l.b16 %v2259
    %v2295 = vunpack.c.l.b16 %v2260
    %v2296 = vunpack.c.l.b16 %v2261
    %v2297 = vunpack.c.l.b16 %v2262
    %v2298 = vunpack.c.l.b16 %v2263
    %v2299 = vunpack.c.l.b16 %v2264
    %v2300 = vunpack.c.l.b16 %v2265
    %v2301 = vunpack.c.l.b16 %v2266
    %v2302 = vpack.c.b16 %v2288, %v2287
    %v2303 = vpack.c.b16 %v2290, %v2289
    %v2304 = vpack.c.b16 %v2292, %v2291
    %v2305 = vpack.c.b16 %v2294, %v2293
    %v2306 = vpack.c.b16 %v2296, %v2295
    %v2307 = vpack.c.b16 %v2298, %v2297
    %v2308 = vpack.c.b16 %v2300, %v2299
    %v2309 = vpack.c.b16 %v2301, %v2301
    %vm2317 = vcmask 982016
    %v2319 = vsel %vm2317, %v2267, 0
    %v2322 = vsel %vm175, %v2309, 0
    %2324 = vmatpush.bf16.msra.mxu0 %v2322
    %2325 = vmatpush.bf16.msra.mxu0 %v2308
    %2326 = vmatpush.bf16.msra.mxu0 %v2307
    %2327 = vmatpush.bf16.msra.mxu0 %v2306
    %2328 = vmatpush.bf16.msra.mxu0 %v2305
    %2329 = vmatpush.bf16.msra.mxu0 %v2304
    %2330 = vmatpush.bf16.msra.mxu0 %v2303
    %2331 = vmatpush.bf16.msra.mxu0 %v2302
    %2332 = vmatmul.bf16.gmra.mxu0 %v2319
    %v2333 = vpop.f32.mrf.mxu0
    %v2334 = vadd.f32 %v2270, %v2333
    %v2335 = vpop.f32.mrf.mxu0
    %2336 = vdwg.mxu0
    %v2337 = vmax.f32 %v2334, 0.0
    %v2338 = vld [vmem:[%s9] sm:$0xf]
    %v2339 = vld [vmem:[%s9 + $0x4] sm:$0xf]
    %v2340 = vld [vmem:[%s9 + $0x8] sm:$0xf]
    %v2341 = vld [vmem:[%s9 + $0xc] sm:$0xf]
    %v2342 = vld [vmem:[%s9 + $0x10] sm:$0xf]
    %v2343 = vld [vmem:[%s9 + $0x14] sm:$0xf]
    %v2344 = vld [vmem:[%s9 + $0x18] sm:$0xf]
    %v2345 = vld [vmem:[%s9 + $0x1c] sm:$0xf]
    %v2346 = vld [vmem:[%s9 + $0x20] sm:$0xf]
    %v2347 = vld [vmem:[%s9 + $0x24] sm:$0xf]
    %v2348 = vld [vmem:[%s9 + $0x28] sm:$0x3]
    %v2349 = vpack.c.bf16 %v2337, %v2337
    %v2350 = vld [vmem:[%s10] sm:$0x1]
    %v2352 = vperm.slane %v2350, 0
    %v2365 = vunpack.c.l.b16 %v2338
    %v2366 = vunpack.c.l.b16 %v2339
    %v2367 = vunpack.c.l.b16 %v2340
    %v2368 = vunpack.c.l.b16 %v2341
    %v2369 = vunpack.c.l.b16 %v2342
    %v2370 = vunpack.c.l.b16 %v2343
    %v2371 = vunpack.c.l.b16 %v2344
    %v2372 = vunpack.c.l.b16 %v2345
    %v2373 = vunpack.c.l.b16 %v2346
    %v2374 = vunpack.c.l.b16 %v2347
    %v2375 = vunpack.c.l.b16 %v2348
    %v2376 = vpack.c.b16 %v2366, %v2365
    %v2377 = vpack.c.b16 %v2368, %v2367
    %v2378 = vpack.c.b16 %v2370, %v2369
    %v2379 = vpack.c.b16 %v2372, %v2371
    %v2380 = vpack.c.b16 %v2374, %v2373
    %v2381 = vpack.c.b16 %v2375, %v2375
    %v2388 = vsel %vm200, %v2349, 0
    %v2391 = vsel %vm2143, %v2381, 0
    %2393 = vmatpush.bf16.msra.mxu0 0
    %2394 = vmatpush.bf16.msra.mxu0 0
    %2395 = vmatpush.bf16.msra.mxu0 %v2391
    %2396 = vmatpush.bf16.msra.mxu0 %v2380
    %2397 = vmatpush.bf16.msra.mxu0 %v2379
    %2398 = vmatpush.bf16.msra.mxu0 %v2378
    %2399 = vmatpush.bf16.msra.mxu0 %v2377
    %2400 = vmatpush.bf16.msra.mxu0 %v2376
    %2401 = vmatmul.bf16.gmra.mxu0 %v2388
    %v2402 = vpop.f32.mrf.mxu0
    %v2403 = vadd.f32 %v2352, %v2402
    %v2404 = vpop.f32.mrf.mxu0
    %2405 = vdwg.mxu0
    %vm2406 = vcmask 74752
    %2407 = vst.msk [vmem:[#allocation2] sm:$0x3] %vm2406, %v2403
    // Predicated region
    $region46: #{digit_classifier_forward.1} parent=1 // pred_check
      _
    $region47: #{digit_classifier_forward.1} parent=1 // pred_check_branch
      %2409 = sbr.rel (0) target = $region49
    $region48: #{digit_classifier_forward.1} parent=1 // pred_region
      %2411 = vsyncadd [#allocation3], 0
      %s2413 = sshll.u32 [#allocation2], 4
      %s2414 = int_to_ptr.vmem [resolvable:$true] %s2413
      %s2415 = sshll.u32 %s11, 4
      %s2416 = int_to_ptr.hbm [resolvable:$true] %s2415
      %2418 = dma.vmem_to_hbm [thread:$0]  %s2414, 32, %s2416, [#allocation3]
    $region49: #{digit_classifier_forward.1} parent=1 // pred_fallthru
      _
    // Predicated region
    $region50: #{digit_classifier_forward.1} parent=1 // pred_check
      _
    $region51: #{digit_classifier_forward.1} parent=1 // pred_check_branch
      %2420 = sbr.rel (0) target = $region53
    $region52: #{digit_classifier_forward.1} parent=1 // pred_region
      %2422 = dma.done [#allocation3], 32
    $region53: #{digit_classifier_forward.1} parent=1 // pred_fallthru
      _
    %2423 = vsyncpa [#allocation3], 1

</llo_original>
